<compile_context>
chip_gen: v5e
topology: v5e:2x2
jax: 0.10.0
libtpu: 0.0.40
codegen_flags: <defaults>
</compile_context>

<pallas_src>
import functools

import jax
import jax.numpy as jnp
from jax import lax
from jax.experimental import pallas as pl
from jax.experimental.pallas import tpu as pltpu

# Layer topology of the PyTorch module: (in_features, out_features, relu_after)
_LAYERS = (
    (9, 5, True),   # encoder Linear(9,5) + ReLU
    (5, 4, True),   # encoder Linear(5,4) + ReLU
    (4, 3, False),  # encoder Linear(4,3)            -> encode
    (3, 4, True),   # decoder Linear(3,4) + ReLU
    (4, 5, True),   # decoder Linear(4,5) + ReLU
    (5, 9, False),  # decoder Linear(5,9)            -> decode
)

F_IN, F_ENC, F_DEC = 9, 3, 9
LANES = 128


def _pack_params(params):
    """Flatten all (W, b) pairs into one 1-D f32 vector + static offset table."""
    flat, offsets, pos = [], [], 0
    for (din, dout, _), (w, b) in zip(_LAYERS, params):
        w = jnp.asarray(w, jnp.float32).reshape(dout, din)   # torch layout (out, in)
        b = jnp.asarray(b, jnp.float32).reshape(dout)
        flat.append(w.reshape(-1))
        flat.append(b)
        offsets.append((pos, pos + dout * din))               # (w_off, b_off)
        pos += dout * din + dout
    return jnp.concatenate(flat), tuple(offsets)


def _autocoder_kernel(x_ref, wb_ref, enc_ref, dec_ref, *, offsets, inner_sub):
    """x_ref: (9, T, 128) VMEM; wb_ref: (P,) SMEM; enc/dec: (3, T, 128)/(9, T, 128)."""
    tile_chunks = x_ref.shape[1]
    n_inner = tile_chunks // inner_sub

    # Hoist ALL weight/bias scalar reads above the chunk loop (JAX does not CSE
    # these; re-reading per chunk would re-issue ~184 scalar loads every chunk).
    wts = []
    for li, (din, dout, _) in enumerate(_LAYERS):
        w_off, b_off = offsets[li]
        w = tuple(tuple(wb_ref[w_off + o * din + i] for i in range(din))
                  for o in range(dout))
        b = tuple(wb_ref[b_off + o] for o in range(dout))
        wts.append((w, b))

    def linear(rows, layer_idx):
        # out[o] = (ReLU?)(b[o] + sum_i W[o, i] * rows[i])  -- scalar-broadcast VPU math
        din, dout, relu = _LAYERS[layer_idx]
        w, b = wts[layer_idx]
        out = []
        for o in range(dout):
            acc = rows[0] * w[o][0]
            for i in range(1, din):
                acc = acc + rows[i] * w[o][i]
            acc = acc + b[o]
            if relu:
                acc = jnp.maximum(acc, 0.0)
            out.append(acc)
        return out

    def chunk_body(c, carry):
        s = pl.multiple_of(c * inner_sub, inner_sub)
        sl = pl.ds(s, inner_sub)
        # Each feature row is a dense (inner_sub, 128) slab: batch fills both the
        # lane and sublane axes of every vreg; loads/stores are unmasked.
        h = [x_ref[i, sl, :] for i in range(F_IN)]
        h = linear(h, 0)
        h = linear(h, 1)
        enc = linear(h, 2)            # encode (no ReLU), matches module
        h = linear(enc, 3)
        h = linear(h, 4)
        dec = linear(h, 5)            # decode (no ReLU)
        for o in range(F_ENC):
            enc_ref[o, sl, :] = enc[o]
        for o in range(F_DEC):
            dec_ref[o, sl, :] = dec[o]
        return carry

    lax.fori_loop(0, n_inner, chunk_body, None)


def autocoder_forward(x, params, *, max_tile_chunks=256):
    """x: (B, 9) float32; params: list of 6 (W, b) with W shaped (out, in) like torch.

    Returns (encode (B, 3), decode (B, 9)) — same semantics as Autocoder.forward.
    """
    x = jnp.asarray(x, jnp.float32)
    B = x.shape[0]

    # Batch tiling in units of 128-lane chunks, grouped 8 chunks per sublane tile.
    nb = max(8, pl.cdiv(B, LANES))
    nb = pl.cdiv(nb, 8) * 8
    if nb <= 8:
        tile_chunks = nb
        grid_n = 1
    else:
        # >= 2 grid steps so the "parallel" batch axis actually feeds both v7x
        # TensorCores; tiles capped at 256 chunks (32K lanes, ~5 MiB w/ double buf).
        n_steps = max(2, pl.cdiv(nb, max_tile_chunks))
        tile_chunks = pl.cdiv(pl.cdiv(nb, n_steps), 8) * 8
        grid_n = pl.cdiv(nb, tile_chunks)
    nb_pad = grid_n * tile_chunks
    b_pad = nb_pad * LANES
    inner_sub = 16 if tile_chunks % 16 == 0 else 8

    # Lane-dense, feature-unpadded layout: (9, batch_chunks, 128). Pad+transpose is
    # a single fused HBM pass under jit; callers wanting zero wrapper passes can
    # feed/consume the (feat, batch) layout directly.
    x_t = (jnp.zeros((F_IN, b_pad), jnp.float32)
           .at[:, :B].set(x.T)
           .reshape(F_IN, nb_pad, LANES))

    wb_flat, offsets = _pack_params(params)
    kernel = functools.partial(_autocoder_kernel, offsets=offsets,
                               inner_sub=inner_sub)

    enc_t, dec_t = pl.pallas_call(
        kernel,
        out_shape=(
            jax.ShapeDtypeStruct((F_ENC, nb_pad, LANES), jnp.float32),
            jax.ShapeDtypeStruct((F_DEC, nb_pad, LANES), jnp.float32),
        ),
        grid=(grid_n,),
        in_specs=[
            pl.BlockSpec((F_IN, tile_chunks, LANES), lambda i: (0, i, 0)),
            # 184-float packed param slab, whole-array SMEM resident. Its block is
            # grid-invariant (no index_map / no block_shape) and ~1 KiB, so there is
            # no per-step HBM refetch of any significance.
            pl.BlockSpec(memory_space=pltpu.MemorySpace.SMEM),
        ],
        out_specs=(
            pl.BlockSpec((F_ENC, tile_chunks, LANES), lambda i: (0, i, 0)),
            pl.BlockSpec((F_DEC, tile_chunks, LANES), lambda i: (0, i, 0)),
        ),
        compiler_params=pltpu.CompilerParams(
            dimension_semantics=("parallel",)),
    )(x_t, wb_flat)

    encode = enc_t.reshape(F_ENC, b_pad)[:, :B].T
    decode = dec_t.reshape(F_DEC, b_pad)[:, :B].T
    return encode, decode


def init_params(key):
    """Deterministic init matching the PyTorch module's layer shapes."""
    params = []
    for (in_d, out_d, _) in _LAYERS:
        key, kw, kb = jax.random.split(key, 3)
        bound = 1.0 / jnp.sqrt(in_d)  # same scale family as torch default init
        w = jax.random.uniform(kw, (out_d, in_d), jnp.float32, -bound, bound)
        b = jax.random.uniform(kb, (out_d,), jnp.float32, -bound, bound)
        params.append((w, b))
    return params


def _reference_forward(x, params):
    """Pure-JAX fp32 reference with exact f32 matmuls."""
    h = jnp.asarray(x, jnp.float32)
    enc = None
    for idx, ((_, _, relu), (w, b)) in enumerate(zip(_LAYERS, params)):
        h = jnp.dot(h, jnp.asarray(w, jnp.float32).T,
                    precision=jax.lax.Precision.HIGHEST) + jnp.asarray(b, jnp.float32)
        if relu:
            h = jnp.maximum(h, 0.0)
        if idx == 2:
            enc = h
    return enc, h


if __name__ == "__main__":
    key = jax.random.PRNGKey(0)
    key, kx1, kx2 = jax.random.split(key, 3)
    params = init_params(key)

    fwd = jax.jit(autocoder_forward)

    # Small case: single grid step, single inner chunk.
    B1 = 8
    x1 = jax.random.normal(kx1, (B1, F_IN), jnp.float32)
    enc1, dec1 = fwd(x1, params)
    jax.block_until_ready((enc1, dec1))
    assert enc1.shape == (B1, F_ENC) and dec1.shape == (B1, F_DEC)
    r_enc1, r_dec1 = _reference_forward(x1, params)
    assert jnp.allclose(enc1, r_enc1, atol=1e-4, rtol=1e-4)
    assert jnp.allclose(dec1, r_dec1, atol=1e-4, rtol=1e-4)

    # Larger case: 2-step grid (exercises both v7x cores) + multi-iteration inner loop.
    B2 = 8192
    x2 = jax.random.normal(kx2, (B2, F_IN), jnp.float32)
    enc2, dec2 = fwd(x2, params)
    jax.block_until_ready((enc2, dec2))
    assert enc2.shape == (B2, F_ENC) and dec2.shape == (B2, F_DEC)
    r_enc2, r_dec2 = _reference_forward(x2, params)
    assert jnp.allclose(enc2, r_enc2, atol=1e-4, rtol=1e-4)
    assert jnp.allclose(dec2, r_dec2, atol=1e-4, rtol=1e-4)

    print("KERNEL_OK")
</pallas_src>

<mosaic_0001>
module attributes {stable_mosaic.version = 11 : i64} {
  func.func @_autocoder_kernel(%arg0: i32, %arg1: memref<9x8x128xf32, #tpu.memory_space<vmem>>, %arg2: memref<184xf32, #tpu.memory_space<smem>>, %arg3: memref<3x8x128xf32, #tpu.memory_space<vmem>>, %arg4: memref<9x8x128xf32, #tpu.memory_space<vmem>>) attributes {dimension_semantics = [#tpu.dimension_semantics<parallel>], iteration_bounds = array<i64: 1>, scalar_prefetch = 0 : i64, scratch_operands = 0 : i64, tpu.core_type = #tpu.core_type<tc>, window_params = [{transform_indices = @transform_0, window_bounds = array<i64: 9, 8, 128>}, {transform_indices = @transform_1, window_bounds = array<i64: 184>}, {transform_indices = @transform_2, window_bounds = array<i64: 3, 8, 128>}, {transform_indices = @transform_3, window_bounds = array<i64: 9, 8, 128>}]} {
    %c0 = arith.constant 0 : index
    %0 = memref.load %arg2[%c0] : memref<184xf32, #tpu.memory_space<smem>>
    %c1 = arith.constant 1 : index
    %1 = memref.load %arg2[%c1] : memref<184xf32, #tpu.memory_space<smem>>
    %c2 = arith.constant 2 : index
    %2 = memref.load %arg2[%c2] : memref<184xf32, #tpu.memory_space<smem>>
    %c3 = arith.constant 3 : index
    %3 = memref.load %arg2[%c3] : memref<184xf32, #tpu.memory_space<smem>>
    %c4 = arith.constant 4 : index
    %4 = memref.load %arg2[%c4] : memref<184xf32, #tpu.memory_space<smem>>
    %c5 = arith.constant 5 : index
    %5 = memref.load %arg2[%c5] : memref<184xf32, #tpu.memory_space<smem>>
    %c6 = arith.constant 6 : index
    %6 = memref.load %arg2[%c6] : memref<184xf32, #tpu.memory_space<smem>>
    %c7 = arith.constant 7 : index
    %7 = memref.load %arg2[%c7] : memref<184xf32, #tpu.memory_space<smem>>
    %c8 = arith.constant 8 : index
    %8 = memref.load %arg2[%c8] : memref<184xf32, #tpu.memory_space<smem>>
    %c9 = arith.constant 9 : index
    %9 = memref.load %arg2[%c9] : memref<184xf32, #tpu.memory_space<smem>>
    %c10 = arith.constant 10 : index
    %10 = memref.load %arg2[%c10] : memref<184xf32, #tpu.memory_space<smem>>
    %c11 = arith.constant 11 : index
    %11 = memref.load %arg2[%c11] : memref<184xf32, #tpu.memory_space<smem>>
    %c12 = arith.constant 12 : index
    %12 = memref.load %arg2[%c12] : memref<184xf32, #tpu.memory_space<smem>>
    %c13 = arith.constant 13 : index
    %13 = memref.load %arg2[%c13] : memref<184xf32, #tpu.memory_space<smem>>
    %c14 = arith.constant 14 : index
    %14 = memref.load %arg2[%c14] : memref<184xf32, #tpu.memory_space<smem>>
    %c15 = arith.constant 15 : index
    %15 = memref.load %arg2[%c15] : memref<184xf32, #tpu.memory_space<smem>>
    %c16 = arith.constant 16 : index
    %16 = memref.load %arg2[%c16] : memref<184xf32, #tpu.memory_space<smem>>
    %c17 = arith.constant 17 : index
    %17 = memref.load %arg2[%c17] : memref<184xf32, #tpu.memory_space<smem>>
    %c18 = arith.constant 18 : index
    %18 = memref.load %arg2[%c18] : memref<184xf32, #tpu.memory_space<smem>>
    %c19 = arith.constant 19 : index
    %19 = memref.load %arg2[%c19] : memref<184xf32, #tpu.memory_space<smem>>
    %c20 = arith.constant 20 : index
    %20 = memref.load %arg2[%c20] : memref<184xf32, #tpu.memory_space<smem>>
    %c21 = arith.constant 21 : index
    %21 = memref.load %arg2[%c21] : memref<184xf32, #tpu.memory_space<smem>>
    %c22 = arith.constant 22 : index
    %22 = memref.load %arg2[%c22] : memref<184xf32, #tpu.memory_space<smem>>
    %c23 = arith.constant 23 : index
    %23 = memref.load %arg2[%c23] : memref<184xf32, #tpu.memory_space<smem>>
    %c24 = arith.constant 24 : index
    %24 = memref.load %arg2[%c24] : memref<184xf32, #tpu.memory_space<smem>>
    %c25 = arith.constant 25 : index
    %25 = memref.load %arg2[%c25] : memref<184xf32, #tpu.memory_space<smem>>
    %c26 = arith.constant 26 : index
    %26 = memref.load %arg2[%c26] : memref<184xf32, #tpu.memory_space<smem>>
    %c27 = arith.constant 27 : index
    %27 = memref.load %arg2[%c27] : memref<184xf32, #tpu.memory_space<smem>>
    %c28 = arith.constant 28 : index
    %28 = memref.load %arg2[%c28] : memref<184xf32, #tpu.memory_space<smem>>
    %c29 = arith.constant 29 : index
    %29 = memref.load %arg2[%c29] : memref<184xf32, #tpu.memory_space<smem>>
    %c30 = arith.constant 30 : index
    %30 = memref.load %arg2[%c30] : memref<184xf32, #tpu.memory_space<smem>>
    %c31 = arith.constant 31 : index
    %31 = memref.load %arg2[%c31] : memref<184xf32, #tpu.memory_space<smem>>
    %c32 = arith.constant 32 : index
    %32 = memref.load %arg2[%c32] : memref<184xf32, #tpu.memory_space<smem>>
    %c33 = arith.constant 33 : index
    %33 = memref.load %arg2[%c33] : memref<184xf32, #tpu.memory_space<smem>>
    %c34 = arith.constant 34 : index
    %34 = memref.load %arg2[%c34] : memref<184xf32, #tpu.memory_space<smem>>
    %c35 = arith.constant 35 : index
    %35 = memref.load %arg2[%c35] : memref<184xf32, #tpu.memory_space<smem>>
    %c36 = arith.constant 36 : index
    %36 = memref.load %arg2[%c36] : memref<184xf32, #tpu.memory_space<smem>>
    %c37 = arith.constant 37 : index
    %37 = memref.load %arg2[%c37] : memref<184xf32, #tpu.memory_space<smem>>
    %c38 = arith.constant 38 : index
    %38 = memref.load %arg2[%c38] : memref<184xf32, #tpu.memory_space<smem>>
    %c39 = arith.constant 39 : index
    %39 = memref.load %arg2[%c39] : memref<184xf32, #tpu.memory_space<smem>>
    %c40 = arith.constant 40 : index
    %40 = memref.load %arg2[%c40] : memref<184xf32, #tpu.memory_space<smem>>
    %c41 = arith.constant 41 : index
    %41 = memref.load %arg2[%c41] : memref<184xf32, #tpu.memory_space<smem>>
    %c42 = arith.constant 42 : index
    %42 = memref.load %arg2[%c42] : memref<184xf32, #tpu.memory_space<smem>>
    %c43 = arith.constant 43 : index
    %43 = memref.load %arg2[%c43] : memref<184xf32, #tpu.memory_space<smem>>
    %c44 = arith.constant 44 : index
    %44 = memref.load %arg2[%c44] : memref<184xf32, #tpu.memory_space<smem>>
    %c45 = arith.constant 45 : index
    %45 = memref.load %arg2[%c45] : memref<184xf32, #tpu.memory_space<smem>>
    %c46 = arith.constant 46 : index
    %46 = memref.load %arg2[%c46] : memref<184xf32, #tpu.memory_space<smem>>
    %c47 = arith.constant 47 : index
    %47 = memref.load %arg2[%c47] : memref<184xf32, #tpu.memory_space<smem>>
    %c48 = arith.constant 48 : index
    %48 = memref.load %arg2[%c48] : memref<184xf32, #tpu.memory_space<smem>>
    %c49 = arith.constant 49 : index
    %49 = memref.load %arg2[%c49] : memref<184xf32, #tpu.memory_space<smem>>
    %c50 = arith.constant 50 : index
    %50 = memref.load %arg2[%c50] : memref<184xf32, #tpu.memory_space<smem>>
    %c51 = arith.constant 51 : index
    %51 = memref.load %arg2[%c51] : memref<184xf32, #tpu.memory_space<smem>>
    %c52 = arith.constant 52 : index
    %52 = memref.load %arg2[%c52] : memref<184xf32, #tpu.memory_space<smem>>
    %c53 = arith.constant 53 : index
    %53 = memref.load %arg2[%c53] : memref<184xf32, #tpu.memory_space<smem>>
    %c54 = arith.constant 54 : index
    %54 = memref.load %arg2[%c54] : memref<184xf32, #tpu.memory_space<smem>>
    %c55 = arith.constant 55 : index
    %55 = memref.load %arg2[%c55] : memref<184xf32, #tpu.memory_space<smem>>
    %c56 = arith.constant 56 : index
    %56 = memref.load %arg2[%c56] : memref<184xf32, #tpu.memory_space<smem>>
    %c57 = arith.constant 57 : index
    %57 = memref.load %arg2[%c57] : memref<184xf32, #tpu.memory_space<smem>>
    %c58 = arith.constant 58 : index
    %58 = memref.load %arg2[%c58] : memref<184xf32, #tpu.memory_space<smem>>
    %c59 = arith.constant 59 : index
    %59 = memref.load %arg2[%c59] : memref<184xf32, #tpu.memory_space<smem>>
    %c60 = arith.constant 60 : index
    %60 = memref.load %arg2[%c60] : memref<184xf32, #tpu.memory_space<smem>>
    %c61 = arith.constant 61 : index
    %61 = memref.load %arg2[%c61] : memref<184xf32, #tpu.memory_space<smem>>
    %c62 = arith.constant 62 : index
    %62 = memref.load %arg2[%c62] : memref<184xf32, #tpu.memory_space<smem>>
    %c63 = arith.constant 63 : index
    %63 = memref.load %arg2[%c63] : memref<184xf32, #tpu.memory_space<smem>>
    %c64 = arith.constant 64 : index
    %64 = memref.load %arg2[%c64] : memref<184xf32, #tpu.memory_space<smem>>
    %c65 = arith.constant 65 : index
    %65 = memref.load %arg2[%c65] : memref<184xf32, #tpu.memory_space<smem>>
    %c66 = arith.constant 66 : index
    %66 = memref.load %arg2[%c66] : memref<184xf32, #tpu.memory_space<smem>>
    %c67 = arith.constant 67 : index
    %67 = memref.load %arg2[%c67] : memref<184xf32, #tpu.memory_space<smem>>
    %c68 = arith.constant 68 : index
    %68 = memref.load %arg2[%c68] : memref<184xf32, #tpu.memory_space<smem>>
    %c69 = arith.constant 69 : index
    %69 = memref.load %arg2[%c69] : memref<184xf32, #tpu.memory_space<smem>>
    %c70 = arith.constant 70 : index
    %70 = memref.load %arg2[%c70] : memref<184xf32, #tpu.memory_space<smem>>
    %c71 = arith.constant 71 : index
    %71 = memref.load %arg2[%c71] : memref<184xf32, #tpu.memory_space<smem>>
    %c72 = arith.constant 72 : index
    %72 = memref.load %arg2[%c72] : memref<184xf32, #tpu.memory_space<smem>>
    %c73 = arith.constant 73 : index
    %73 = memref.load %arg2[%c73] : memref<184xf32, #tpu.memory_space<smem>>
    %c74 = arith.constant 74 : index
    %74 = memref.load %arg2[%c74] : memref<184xf32, #tpu.memory_space<smem>>
    %c75 = arith.constant 75 : index
    %75 = memref.load %arg2[%c75] : memref<184xf32, #tpu.memory_space<smem>>
    %c76 = arith.constant 76 : index
    %76 = memref.load %arg2[%c76] : memref<184xf32, #tpu.memory_space<smem>>
    %c77 = arith.constant 77 : index
    %77 = memref.load %arg2[%c77] : memref<184xf32, #tpu.memory_space<smem>>
    %c78 = arith.constant 78 : index
    %78 = memref.load %arg2[%c78] : memref<184xf32, #tpu.memory_space<smem>>
    %c79 = arith.constant 79 : index
    %79 = memref.load %arg2[%c79] : memref<184xf32, #tpu.memory_space<smem>>
    %c80 = arith.constant 80 : index
    %80 = memref.load %arg2[%c80] : memref<184xf32, #tpu.memory_space<smem>>
    %c81 = arith.constant 81 : index
    %81 = memref.load %arg2[%c81] : memref<184xf32, #tpu.memory_space<smem>>
    %c82 = arith.constant 82 : index
    %82 = memref.load %arg2[%c82] : memref<184xf32, #tpu.memory_space<smem>>
    %c83 = arith.constant 83 : index
    %83 = memref.load %arg2[%c83] : memref<184xf32, #tpu.memory_space<smem>>
    %c84 = arith.constant 84 : index
    %84 = memref.load %arg2[%c84] : memref<184xf32, #tpu.memory_space<smem>>
    %c85 = arith.constant 85 : index
    %85 = memref.load %arg2[%c85] : memref<184xf32, #tpu.memory_space<smem>>
    %c86 = arith.constant 86 : index
    %86 = memref.load %arg2[%c86] : memref<184xf32, #tpu.memory_space<smem>>
    %c87 = arith.constant 87 : index
    %87 = memref.load %arg2[%c87] : memref<184xf32, #tpu.memory_space<smem>>
    %c88 = arith.constant 88 : index
    %88 = memref.load %arg2[%c88] : memref<184xf32, #tpu.memory_space<smem>>
    %c89 = arith.constant 89 : index
    %89 = memref.load %arg2[%c89] : memref<184xf32, #tpu.memory_space<smem>>
    %c90 = arith.constant 90 : index
    %90 = memref.load %arg2[%c90] : memref<184xf32, #tpu.memory_space<smem>>
    %c91 = arith.constant 91 : index
    %91 = memref.load %arg2[%c91] : memref<184xf32, #tpu.memory_space<smem>>
    %c92 = arith.constant 92 : index
    %92 = memref.load %arg2[%c92] : memref<184xf32, #tpu.memory_space<smem>>
    %c93 = arith.constant 93 : index
    %93 = memref.load %arg2[%c93] : memref<184xf32, #tpu.memory_space<smem>>
    %c94 = arith.constant 94 : index
    %94 = memref.load %arg2[%c94] : memref<184xf32, #tpu.memory_space<smem>>
    %c95 = arith.constant 95 : index
    %95 = memref.load %arg2[%c95] : memref<184xf32, #tpu.memory_space<smem>>
    %c96 = arith.constant 96 : index
    %96 = memref.load %arg2[%c96] : memref<184xf32, #tpu.memory_space<smem>>
    %c97 = arith.constant 97 : index
    %97 = memref.load %arg2[%c97] : memref<184xf32, #tpu.memory_space<smem>>
    %c98 = arith.constant 98 : index
    %98 = memref.load %arg2[%c98] : memref<184xf32, #tpu.memory_space<smem>>
    %c99 = arith.constant 99 : index
    %99 = memref.load %arg2[%c99] : memref<184xf32, #tpu.memory_space<smem>>
    %c100 = arith.constant 100 : index
    %100 = memref.load %arg2[%c100] : memref<184xf32, #tpu.memory_space<smem>>
    %c101 = arith.constant 101 : index
    %101 = memref.load %arg2[%c101] : memref<184xf32, #tpu.memory_space<smem>>
    %c102 = arith.constant 102 : index
    %102 = memref.load %arg2[%c102] : memref<184xf32, #tpu.memory_space<smem>>
    %c103 = arith.constant 103 : index
    %103 = memref.load %arg2[%c103] : memref<184xf32, #tpu.memory_space<smem>>
    %c104 = arith.constant 104 : index
    %104 = memref.load %arg2[%c104] : memref<184xf32, #tpu.memory_space<smem>>
    %c105 = arith.constant 105 : index
    %105 = memref.load %arg2[%c105] : memref<184xf32, #tpu.memory_space<smem>>
    %c106 = arith.constant 106 : index
    %106 = memref.load %arg2[%c106] : memref<184xf32, #tpu.memory_space<smem>>
    %c107 = arith.constant 107 : index
    %107 = memref.load %arg2[%c107] : memref<184xf32, #tpu.memory_space<smem>>
    %c108 = arith.constant 108 : index
    %108 = memref.load %arg2[%c108] : memref<184xf32, #tpu.memory_space<smem>>
    %c109 = arith.constant 109 : index
    %109 = memref.load %arg2[%c109] : memref<184xf32, #tpu.memory_space<smem>>
    %c110 = arith.constant 110 : index
    %110 = memref.load %arg2[%c110] : memref<184xf32, #tpu.memory_space<smem>>
    %c111 = arith.constant 111 : index
    %111 = memref.load %arg2[%c111] : memref<184xf32, #tpu.memory_space<smem>>
    %c112 = arith.constant 112 : index
    %112 = memref.load %arg2[%c112] : memref<184xf32, #tpu.memory_space<smem>>
    %c113 = arith.constant 113 : index
    %113 = memref.load %arg2[%c113] : memref<184xf32, #tpu.memory_space<smem>>
    %c114 = arith.constant 114 : index
    %114 = memref.load %arg2[%c114] : memref<184xf32, #tpu.memory_space<smem>>
    %c115 = arith.constant 115 : index
    %115 = memref.load %arg2[%c115] : memref<184xf32, #tpu.memory_space<smem>>
    %c116 = arith.constant 116 : index
    %116 = memref.load %arg2[%c116] : memref<184xf32, #tpu.memory_space<smem>>
    %c117 = arith.constant 117 : index
    %117 = memref.load %arg2[%c117] : memref<184xf32, #tpu.memory_space<smem>>
    %c118 = arith.constant 118 : index
    %118 = memref.load %arg2[%c118] : memref<184xf32, #tpu.memory_space<smem>>
    %c119 = arith.constant 119 : index
    %119 = memref.load %arg2[%c119] : memref<184xf32, #tpu.memory_space<smem>>
    %c120 = arith.constant 120 : index
    %120 = memref.load %arg2[%c120] : memref<184xf32, #tpu.memory_space<smem>>
    %c121 = arith.constant 121 : index
    %121 = memref.load %arg2[%c121] : memref<184xf32, #tpu.memory_space<smem>>
    %c122 = arith.constant 122 : index
    %122 = memref.load %arg2[%c122] : memref<184xf32, #tpu.memory_space<smem>>
    %c123 = arith.constant 123 : index
    %123 = memref.load %arg2[%c123] : memref<184xf32, #tpu.memory_space<smem>>
    %c124 = arith.constant 124 : index
    %124 = memref.load %arg2[%c124] : memref<184xf32, #tpu.memory_space<smem>>
    %c125 = arith.constant 125 : index
    %125 = memref.load %arg2[%c125] : memref<184xf32, #tpu.memory_space<smem>>
    %c126 = arith.constant 126 : index
    %126 = memref.load %arg2[%c126] : memref<184xf32, #tpu.memory_space<smem>>
    %c127 = arith.constant 127 : index
    %127 = memref.load %arg2[%c127] : memref<184xf32, #tpu.memory_space<smem>>
    %c128 = arith.constant 128 : index
    %128 = memref.load %arg2[%c128] : memref<184xf32, #tpu.memory_space<smem>>
    %c129 = arith.constant 129 : index
    %129 = memref.load %arg2[%c129] : memref<184xf32, #tpu.memory_space<smem>>
    %c130 = arith.constant 130 : index
    %130 = memref.load %arg2[%c130] : memref<184xf32, #tpu.memory_space<smem>>
    %c131 = arith.constant 131 : index
    %131 = memref.load %arg2[%c131] : memref<184xf32, #tpu.memory_space<smem>>
    %c132 = arith.constant 132 : index
    %132 = memref.load %arg2[%c132] : memref<184xf32, #tpu.memory_space<smem>>
    %c133 = arith.constant 133 : index
    %133 = memref.load %arg2[%c133] : memref<184xf32, #tpu.memory_space<smem>>
    %c134 = arith.constant 134 : index
    %134 = memref.load %arg2[%c134] : memref<184xf32, #tpu.memory_space<smem>>
    %c135 = arith.constant 135 : index
    %135 = memref.load %arg2[%c135] : memref<184xf32, #tpu.memory_space<smem>>
    %c136 = arith.constant 136 : index
    %136 = memref.load %arg2[%c136] : memref<184xf32, #tpu.memory_space<smem>>
    %c137 = arith.constant 137 : index
    %137 = memref.load %arg2[%c137] : memref<184xf32, #tpu.memory_space<smem>>
    %c138 = arith.constant 138 : index
    %138 = memref.load %arg2[%c138] : memref<184xf32, #tpu.memory_space<smem>>
    %c139 = arith.constant 139 : index
    %139 = memref.load %arg2[%c139] : memref<184xf32, #tpu.memory_space<smem>>
    %c140 = arith.constant 140 : index
    %140 = memref.load %arg2[%c140] : memref<184xf32, #tpu.memory_space<smem>>
    %c141 = arith.constant 141 : index
    %141 = memref.load %arg2[%c141] : memref<184xf32, #tpu.memory_space<smem>>
    %c142 = arith.constant 142 : index
    %142 = memref.load %arg2[%c142] : memref<184xf32, #tpu.memory_space<smem>>
    %c143 = arith.constant 143 : index
    %143 = memref.load %arg2[%c143] : memref<184xf32, #tpu.memory_space<smem>>
    %c144 = arith.constant 144 : index
    %144 = memref.load %arg2[%c144] : memref<184xf32, #tpu.memory_space<smem>>
    %c145 = arith.constant 145 : index
    %145 = memref.load %arg2[%c145] : memref<184xf32, #tpu.memory_space<smem>>
    %c146 = arith.constant 146 : index
    %146 = memref.load %arg2[%c146] : memref<184xf32, #tpu.memory_space<smem>>
    %c147 = arith.constant 147 : index
    %147 = memref.load %arg2[%c147] : memref<184xf32, #tpu.memory_space<smem>>
    %c148 = arith.constant 148 : index
    %148 = memref.load %arg2[%c148] : memref<184xf32, #tpu.memory_space<smem>>
    %c149 = arith.constant 149 : index
    %149 = memref.load %arg2[%c149] : memref<184xf32, #tpu.memory_space<smem>>
    %c150 = arith.constant 150 : index
    %150 = memref.load %arg2[%c150] : memref<184xf32, #tpu.memory_space<smem>>
    %c151 = arith.constant 151 : index
    %151 = memref.load %arg2[%c151] : memref<184xf32, #tpu.memory_space<smem>>
    %c152 = arith.constant 152 : index
    %152 = memref.load %arg2[%c152] : memref<184xf32, #tpu.memory_space<smem>>
    %c153 = arith.constant 153 : index
    %153 = memref.load %arg2[%c153] : memref<184xf32, #tpu.memory_space<smem>>
    %c154 = arith.constant 154 : index
    %154 = memref.load %arg2[%c154] : memref<184xf32, #tpu.memory_space<smem>>
    %c155 = arith.constant 155 : index
    %155 = memref.load %arg2[%c155] : memref<184xf32, #tpu.memory_space<smem>>
    %c156 = arith.constant 156 : index
    %156 = memref.load %arg2[%c156] : memref<184xf32, #tpu.memory_space<smem>>
    %c157 = arith.constant 157 : index
    %157 = memref.load %arg2[%c157] : memref<184xf32, #tpu.memory_space<smem>>
    %c158 = arith.constant 158 : index
    %158 = memref.load %arg2[%c158] : memref<184xf32, #tpu.memory_space<smem>>
    %c159 = arith.constant 159 : index
    %159 = memref.load %arg2[%c159] : memref<184xf32, #tpu.memory_space<smem>>
    %c160 = arith.constant 160 : index
    %160 = memref.load %arg2[%c160] : memref<184xf32, #tpu.memory_space<smem>>
    %c161 = arith.constant 161 : index
    %161 = memref.load %arg2[%c161] : memref<184xf32, #tpu.memory_space<smem>>
    %c162 = arith.constant 162 : index
    %162 = memref.load %arg2[%c162] : memref<184xf32, #tpu.memory_space<smem>>
    %c163 = arith.constant 163 : index
    %163 = memref.load %arg2[%c163] : memref<184xf32, #tpu.memory_space<smem>>
    %c164 = arith.constant 164 : index
    %164 = memref.load %arg2[%c164] : memref<184xf32, #tpu.memory_space<smem>>
    %c165 = arith.constant 165 : index
    %165 = memref.load %arg2[%c165] : memref<184xf32, #tpu.memory_space<smem>>
    %c166 = arith.constant 166 : index
    %166 = memref.load %arg2[%c166] : memref<184xf32, #tpu.memory_space<smem>>
    %c167 = arith.constant 167 : index
    %167 = memref.load %arg2[%c167] : memref<184xf32, #tpu.memory_space<smem>>
    %c168 = arith.constant 168 : index
    %168 = memref.load %arg2[%c168] : memref<184xf32, #tpu.memory_space<smem>>
    %c169 = arith.constant 169 : index
    %169 = memref.load %arg2[%c169] : memref<184xf32, #tpu.memory_space<smem>>
    %c170 = arith.constant 170 : index
    %170 = memref.load %arg2[%c170] : memref<184xf32, #tpu.memory_space<smem>>
    %c171 = arith.constant 171 : index
    %171 = memref.load %arg2[%c171] : memref<184xf32, #tpu.memory_space<smem>>
    %c172 = arith.constant 172 : index
    %172 = memref.load %arg2[%c172] : memref<184xf32, #tpu.memory_space<smem>>
    %c173 = arith.constant 173 : index
    %173 = memref.load %arg2[%c173] : memref<184xf32, #tpu.memory_space<smem>>
    %c174 = arith.constant 174 : index
    %174 = memref.load %arg2[%c174] : memref<184xf32, #tpu.memory_space<smem>>
    %c175 = arith.constant 175 : index
    %175 = memref.load %arg2[%c175] : memref<184xf32, #tpu.memory_space<smem>>
    %c176 = arith.constant 176 : index
    %176 = memref.load %arg2[%c176] : memref<184xf32, #tpu.memory_space<smem>>
    %c177 = arith.constant 177 : index
    %177 = memref.load %arg2[%c177] : memref<184xf32, #tpu.memory_space<smem>>
    %c178 = arith.constant 178 : index
    %178 = memref.load %arg2[%c178] : memref<184xf32, #tpu.memory_space<smem>>
    %c179 = arith.constant 179 : index
    %179 = memref.load %arg2[%c179] : memref<184xf32, #tpu.memory_space<smem>>
    %c180 = arith.constant 180 : index
    %180 = memref.load %arg2[%c180] : memref<184xf32, #tpu.memory_space<smem>>
    %c181 = arith.constant 181 : index
    %181 = memref.load %arg2[%c181] : memref<184xf32, #tpu.memory_space<smem>>
    %c182 = arith.constant 182 : index
    %182 = memref.load %arg2[%c182] : memref<184xf32, #tpu.memory_space<smem>>
    %c183 = arith.constant 183 : index
    %183 = memref.load %arg2[%c183] : memref<184xf32, #tpu.memory_space<smem>>
    %c0_i32 = arith.constant 0 : i32
    %c8_i32 = arith.constant 8 : i32
    %184 = arith.muli %c0_i32, %c8_i32 : i32
    %185 = tpu.assume_multiple %184, 8 : i32
    %c0_0 = arith.constant 0 : index
    %186 = arith.index_cast %185 : i32 to index
    %c0_1 = arith.constant 0 : index
    %187 = vector.load %arg1[%c0_0, %186, %c0_1] : memref<9x8x128xf32, #tpu.memory_space<vmem>>, vector<1x8x128xf32>
    %188 = vector.shape_cast %187 : vector<1x8x128xf32> to vector<8x128xf32>
    %c1_2 = arith.constant 1 : index
    %189 = arith.index_cast %185 : i32 to index
    %c0_3 = arith.constant 0 : index
    %190 = vector.load %arg1[%c1_2, %189, %c0_3] : memref<9x8x128xf32, #tpu.memory_space<vmem>>, vector<1x8x128xf32>
    %191 = vector.shape_cast %190 : vector<1x8x128xf32> to vector<8x128xf32>
    %c2_4 = arith.constant 2 : index
    %192 = arith.index_cast %185 : i32 to index
    %c0_5 = arith.constant 0 : index
    %193 = vector.load %arg1[%c2_4, %192, %c0_5] : memref<9x8x128xf32, #tpu.memory_space<vmem>>, vector<1x8x128xf32>
    %194 = vector.shape_cast %193 : vector<1x8x128xf32> to vector<8x128xf32>
    %c3_6 = arith.constant 3 : index
    %195 = arith.index_cast %185 : i32 to index
    %c0_7 = arith.constant 0 : index
    %196 = vector.load %arg1[%c3_6, %195, %c0_7] : memref<9x8x128xf32, #tpu.memory_space<vmem>>, vector<1x8x128xf32>
    %197 = vector.shape_cast %196 : vector<1x8x128xf32> to vector<8x128xf32>
    %c4_8 = arith.constant 4 : index
    %198 = arith.index_cast %185 : i32 to index
    %c0_9 = arith.constant 0 : index
    %199 = vector.load %arg1[%c4_8, %198, %c0_9] : memref<9x8x128xf32, #tpu.memory_space<vmem>>, vector<1x8x128xf32>
    %200 = vector.shape_cast %199 : vector<1x8x128xf32> to vector<8x128xf32>
    %c5_10 = arith.constant 5 : index
    %201 = arith.index_cast %185 : i32 to index
    %c0_11 = arith.constant 0 : index
    %202 = vector.load %arg1[%c5_10, %201, %c0_11] : memref<9x8x128xf32, #tpu.memory_space<vmem>>, vector<1x8x128xf32>
    %203 = vector.shape_cast %202 : vector<1x8x128xf32> to vector<8x128xf32>
    %c6_12 = arith.constant 6 : index
    %204 = arith.index_cast %185 : i32 to index
    %c0_13 = arith.constant 0 : index
    %205 = vector.load %arg1[%c6_12, %204, %c0_13] : memref<9x8x128xf32, #tpu.memory_space<vmem>>, vector<1x8x128xf32>
    %206 = vector.shape_cast %205 : vector<1x8x128xf32> to vector<8x128xf32>
    %c7_14 = arith.constant 7 : index
    %207 = arith.index_cast %185 : i32 to index
    %c0_15 = arith.constant 0 : index
    %208 = vector.load %arg1[%c7_14, %207, %c0_15] : memref<9x8x128xf32, #tpu.memory_space<vmem>>, vector<1x8x128xf32>
    %209 = vector.shape_cast %208 : vector<1x8x128xf32> to vector<8x128xf32>
    %c8_16 = arith.constant 8 : index
    %210 = arith.index_cast %185 : i32 to index
    %c0_17 = arith.constant 0 : index
    %211 = vector.load %arg1[%c8_16, %210, %c0_17] : memref<9x8x128xf32, #tpu.memory_space<vmem>>, vector<1x8x128xf32>
    %212 = vector.shape_cast %211 : vector<1x8x128xf32> to vector<8x128xf32>
    %213 = vector.broadcast %0 : f32 to vector<8x128xf32>
    %214 = arith.mulf %188, %213 : vector<8x128xf32>
    %215 = vector.broadcast %1 : f32 to vector<8x128xf32>
    %216 = arith.mulf %191, %215 : vector<8x128xf32>
    %217 = arith.addf %214, %216 : vector<8x128xf32>
    %218 = vector.broadcast %2 : f32 to vector<8x128xf32>
    %219 = arith.mulf %194, %218 : vector<8x128xf32>
    %220 = arith.addf %217, %219 : vector<8x128xf32>
    %221 = vector.broadcast %3 : f32 to vector<8x128xf32>
    %222 = arith.mulf %197, %221 : vector<8x128xf32>
    %223 = arith.addf %220, %222 : vector<8x128xf32>
    %224 = vector.broadcast %4 : f32 to vector<8x128xf32>
    %225 = arith.mulf %200, %224 : vector<8x128xf32>
    %226 = arith.addf %223, %225 : vector<8x128xf32>
    %227 = vector.broadcast %5 : f32 to vector<8x128xf32>
    %228 = arith.mulf %203, %227 : vector<8x128xf32>
    %229 = arith.addf %226, %228 : vector<8x128xf32>
    %230 = vector.broadcast %6 : f32 to vector<8x128xf32>
    %231 = arith.mulf %206, %230 : vector<8x128xf32>
    %232 = arith.addf %229, %231 : vector<8x128xf32>
    %233 = vector.broadcast %7 : f32 to vector<8x128xf32>
    %234 = arith.mulf %209, %233 : vector<8x128xf32>
    %235 = arith.addf %232, %234 : vector<8x128xf32>
    %236 = vector.broadcast %8 : f32 to vector<8x128xf32>
    %237 = arith.mulf %212, %236 : vector<8x128xf32>
    %238 = arith.addf %235, %237 : vector<8x128xf32>
    %239 = vector.broadcast %45 : f32 to vector<8x128xf32>
    %240 = arith.addf %238, %239 : vector<8x128xf32>
    %cst = arith.constant 0.000000e+00 : f32
    %241 = vector.broadcast %cst : f32 to vector<8x128xf32>
    %242 = arith.maximumf %240, %241 : vector<8x128xf32>
    %243 = vector.broadcast %9 : f32 to vector<8x128xf32>
    %244 = arith.mulf %188, %243 : vector<8x128xf32>
    %245 = vector.broadcast %10 : f32 to vector<8x128xf32>
    %246 = arith.mulf %191, %245 : vector<8x128xf32>
    %247 = arith.addf %244, %246 : vector<8x128xf32>
    %248 = vector.broadcast %11 : f32 to vector<8x128xf32>
    %249 = arith.mulf %194, %248 : vector<8x128xf32>
    %250 = arith.addf %247, %249 : vector<8x128xf32>
    %251 = vector.broadcast %12 : f32 to vector<8x128xf32>
    %252 = arith.mulf %197, %251 : vector<8x128xf32>
    %253 = arith.addf %250, %252 : vector<8x128xf32>
    %254 = vector.broadcast %13 : f32 to vector<8x128xf32>
    %255 = arith.mulf %200, %254 : vector<8x128xf32>
    %256 = arith.addf %253, %255 : vector<8x128xf32>
    %257 = vector.broadcast %14 : f32 to vector<8x128xf32>
    %258 = arith.mulf %203, %257 : vector<8x128xf32>
    %259 = arith.addf %256, %258 : vector<8x128xf32>
    %260 = vector.broadcast %15 : f32 to vector<8x128xf32>
    %261 = arith.mulf %206, %260 : vector<8x128xf32>
    %262 = arith.addf %259, %261 : vector<8x128xf32>
    %263 = vector.broadcast %16 : f32 to vector<8x128xf32>
    %264 = arith.mulf %209, %263 : vector<8x128xf32>
    %265 = arith.addf %262, %264 : vector<8x128xf32>
    %266 = vector.broadcast %17 : f32 to vector<8x128xf32>
    %267 = arith.mulf %212, %266 : vector<8x128xf32>
    %268 = arith.addf %265, %267 : vector<8x128xf32>
    %269 = vector.broadcast %46 : f32 to vector<8x128xf32>
    %270 = arith.addf %268, %269 : vector<8x128xf32>
    %cst_18 = arith.constant 0.000000e+00 : f32
    %271 = vector.broadcast %cst_18 : f32 to vector<8x128xf32>
    %272 = arith.maximumf %270, %271 : vector<8x128xf32>
    %273 = vector.broadcast %18 : f32 to vector<8x128xf32>
    %274 = arith.mulf %188, %273 : vector<8x128xf32>
    %275 = vector.broadcast %19 : f32 to vector<8x128xf32>
    %276 = arith.mulf %191, %275 : vector<8x128xf32>
    %277 = arith.addf %274, %276 : vector<8x128xf32>
    %278 = vector.broadcast %20 : f32 to vector<8x128xf32>
    %279 = arith.mulf %194, %278 : vector<8x128xf32>
    %280 = arith.addf %277, %279 : vector<8x128xf32>
    %281 = vector.broadcast %21 : f32 to vector<8x128xf32>
    %282 = arith.mulf %197, %281 : vector<8x128xf32>
    %283 = arith.addf %280, %282 : vector<8x128xf32>
    %284 = vector.broadcast %22 : f32 to vector<8x128xf32>
    %285 = arith.mulf %200, %284 : vector<8x128xf32>
    %286 = arith.addf %283, %285 : vector<8x128xf32>
    %287 = vector.broadcast %23 : f32 to vector<8x128xf32>
    %288 = arith.mulf %203, %287 : vector<8x128xf32>
    %289 = arith.addf %286, %288 : vector<8x128xf32>
    %290 = vector.broadcast %24 : f32 to vector<8x128xf32>
    %291 = arith.mulf %206, %290 : vector<8x128xf32>
    %292 = arith.addf %289, %291 : vector<8x128xf32>
    %293 = vector.broadcast %25 : f32 to vector<8x128xf32>
    %294 = arith.mulf %209, %293 : vector<8x128xf32>
    %295 = arith.addf %292, %294 : vector<8x128xf32>
    %296 = vector.broadcast %26 : f32 to vector<8x128xf32>
    %297 = arith.mulf %212, %296 : vector<8x128xf32>
    %298 = arith.addf %295, %297 : vector<8x128xf32>
    %299 = vector.broadcast %47 : f32 to vector<8x128xf32>
    %300 = arith.addf %298, %299 : vector<8x128xf32>
    %cst_19 = arith.constant 0.000000e+00 : f32
    %301 = vector.broadcast %cst_19 : f32 to vector<8x128xf32>
    %302 = arith.maximumf %300, %301 : vector<8x128xf32>
    %303 = vector.broadcast %27 : f32 to vector<8x128xf32>
    %304 = arith.mulf %188, %303 : vector<8x128xf32>
    %305 = vector.broadcast %28 : f32 to vector<8x128xf32>
    %306 = arith.mulf %191, %305 : vector<8x128xf32>
    %307 = arith.addf %304, %306 : vector<8x128xf32>
    %308 = vector.broadcast %29 : f32 to vector<8x128xf32>
    %309 = arith.mulf %194, %308 : vector<8x128xf32>
    %310 = arith.addf %307, %309 : vector<8x128xf32>
    %311 = vector.broadcast %30 : f32 to vector<8x128xf32>
    %312 = arith.mulf %197, %311 : vector<8x128xf32>
    %313 = arith.addf %310, %312 : vector<8x128xf32>
    %314 = vector.broadcast %31 : f32 to vector<8x128xf32>
    %315 = arith.mulf %200, %314 : vector<8x128xf32>
    %316 = arith.addf %313, %315 : vector<8x128xf32>
    %317 = vector.broadcast %32 : f32 to vector<8x128xf32>
    %318 = arith.mulf %203, %317 : vector<8x128xf32>
    %319 = arith.addf %316, %318 : vector<8x128xf32>
    %320 = vector.broadcast %33 : f32 to vector<8x128xf32>
    %321 = arith.mulf %206, %320 : vector<8x128xf32>
    %322 = arith.addf %319, %321 : vector<8x128xf32>
    %323 = vector.broadcast %34 : f32 to vector<8x128xf32>
    %324 = arith.mulf %209, %323 : vector<8x128xf32>
    %325 = arith.addf %322, %324 : vector<8x128xf32>
    %326 = vector.broadcast %35 : f32 to vector<8x128xf32>
    %327 = arith.mulf %212, %326 : vector<8x128xf32>
    %328 = arith.addf %325, %327 : vector<8x128xf32>
    %329 = vector.broadcast %48 : f32 to vector<8x128xf32>
    %330 = arith.addf %328, %329 : vector<8x128xf32>
    %cst_20 = arith.constant 0.000000e+00 : f32
    %331 = vector.broadcast %cst_20 : f32 to vector<8x128xf32>
    %332 = arith.maximumf %330, %331 : vector<8x128xf32>
    %333 = vector.broadcast %36 : f32 to vector<8x128xf32>
    %334 = arith.mulf %188, %333 : vector<8x128xf32>
    %335 = vector.broadcast %37 : f32 to vector<8x128xf32>
    %336 = arith.mulf %191, %335 : vector<8x128xf32>
    %337 = arith.addf %334, %336 : vector<8x128xf32>
    %338 = vector.broadcast %38 : f32 to vector<8x128xf32>
    %339 = arith.mulf %194, %338 : vector<8x128xf32>
    %340 = arith.addf %337, %339 : vector<8x128xf32>
    %341 = vector.broadcast %39 : f32 to vector<8x128xf32>
    %342 = arith.mulf %197, %341 : vector<8x128xf32>
    %343 = arith.addf %340, %342 : vector<8x128xf32>
    %344 = vector.broadcast %40 : f32 to vector<8x128xf32>
    %345 = arith.mulf %200, %344 : vector<8x128xf32>
    %346 = arith.addf %343, %345 : vector<8x128xf32>
    %347 = vector.broadcast %41 : f32 to vector<8x128xf32>
    %348 = arith.mulf %203, %347 : vector<8x128xf32>
    %349 = arith.addf %346, %348 : vector<8x128xf32>
    %350 = vector.broadcast %42 : f32 to vector<8x128xf32>
    %351 = arith.mulf %206, %350 : vector<8x128xf32>
    %352 = arith.addf %349, %351 : vector<8x128xf32>
    %353 = vector.broadcast %43 : f32 to vector<8x128xf32>
    %354 = arith.mulf %209, %353 : vector<8x128xf32>
    %355 = arith.addf %352, %354 : vector<8x128xf32>
    %356 = vector.broadcast %44 : f32 to vector<8x128xf32>
    %357 = arith.mulf %212, %356 : vector<8x128xf32>
    %358 = arith.addf %355, %357 : vector<8x128xf32>
    %359 = vector.broadcast %49 : f32 to vector<8x128xf32>
    %360 = arith.addf %358, %359 : vector<8x128xf32>
    %cst_21 = arith.constant 0.000000e+00 : f32
    %361 = vector.broadcast %cst_21 : f32 to vector<8x128xf32>
    %362 = arith.maximumf %360, %361 : vector<8x128xf32>
    %363 = vector.broadcast %50 : f32 to vector<8x128xf32>
    %364 = arith.mulf %242, %363 : vector<8x128xf32>
    %365 = vector.broadcast %51 : f32 to vector<8x128xf32>
    %366 = arith.mulf %272, %365 : vector<8x128xf32>
    %367 = arith.addf %364, %366 : vector<8x128xf32>
    %368 = vector.broadcast %52 : f32 to vector<8x128xf32>
    %369 = arith.mulf %302, %368 : vector<8x128xf32>
    %370 = arith.addf %367, %369 : vector<8x128xf32>
    %371 = vector.broadcast %53 : f32 to vector<8x128xf32>
    %372 = arith.mulf %332, %371 : vector<8x128xf32>
    %373 = arith.addf %370, %372 : vector<8x128xf32>
    %374 = vector.broadcast %54 : f32 to vector<8x128xf32>
    %375 = arith.mulf %362, %374 : vector<8x128xf32>
    %376 = arith.addf %373, %375 : vector<8x128xf32>
    %377 = vector.broadcast %70 : f32 to vector<8x128xf32>
    %378 = arith.addf %376, %377 : vector<8x128xf32>
    %cst_22 = arith.constant 0.000000e+00 : f32
    %379 = vector.broadcast %cst_22 : f32 to vector<8x128xf32>
    %380 = arith.maximumf %378, %379 : vector<8x128xf32>
    %381 = vector.broadcast %55 : f32 to vector<8x128xf32>
    %382 = arith.mulf %242, %381 : vector<8x128xf32>
    %383 = vector.broadcast %56 : f32 to vector<8x128xf32>
    %384 = arith.mulf %272, %383 : vector<8x128xf32>
    %385 = arith.addf %382, %384 : vector<8x128xf32>
    %386 = vector.broadcast %57 : f32 to vector<8x128xf32>
    %387 = arith.mulf %302, %386 : vector<8x128xf32>
    %388 = arith.addf %385, %387 : vector<8x128xf32>
    %389 = vector.broadcast %58 : f32 to vector<8x128xf32>
    %390 = arith.mulf %332, %389 : vector<8x128xf32>
    %391 = arith.addf %388, %390 : vector<8x128xf32>
    %392 = vector.broadcast %59 : f32 to vector<8x128xf32>
    %393 = arith.mulf %362, %392 : vector<8x128xf32>
    %394 = arith.addf %391, %393 : vector<8x128xf32>
    %395 = vector.broadcast %71 : f32 to vector<8x128xf32>
    %396 = arith.addf %394, %395 : vector<8x128xf32>
    %cst_23 = arith.constant 0.000000e+00 : f32
    %397 = vector.broadcast %cst_23 : f32 to vector<8x128xf32>
    %398 = arith.maximumf %396, %397 : vector<8x128xf32>
    %399 = vector.broadcast %60 : f32 to vector<8x128xf32>
    %400 = arith.mulf %242, %399 : vector<8x128xf32>
    %401 = vector.broadcast %61 : f32 to vector<8x128xf32>
    %402 = arith.mulf %272, %401 : vector<8x128xf32>
    %403 = arith.addf %400, %402 : vector<8x128xf32>
    %404 = vector.broadcast %62 : f32 to vector<8x128xf32>
    %405 = arith.mulf %302, %404 : vector<8x128xf32>
    %406 = arith.addf %403, %405 : vector<8x128xf32>
    %407 = vector.broadcast %63 : f32 to vector<8x128xf32>
    %408 = arith.mulf %332, %407 : vector<8x128xf32>
    %409 = arith.addf %406, %408 : vector<8x128xf32>
    %410 = vector.broadcast %64 : f32 to vector<8x128xf32>
    %411 = arith.mulf %362, %410 : vector<8x128xf32>
    %412 = arith.addf %409, %411 : vector<8x128xf32>
    %413 = vector.broadcast %72 : f32 to vector<8x128xf32>
    %414 = arith.addf %412, %413 : vector<8x128xf32>
    %cst_24 = arith.constant 0.000000e+00 : f32
    %415 = vector.broadcast %cst_24 : f32 to vector<8x128xf32>
    %416 = arith.maximumf %414, %415 : vector<8x128xf32>
    %417 = vector.broadcast %65 : f32 to vector<8x128xf32>
    %418 = arith.mulf %242, %417 : vector<8x128xf32>
    %419 = vector.broadcast %66 : f32 to vector<8x128xf32>
    %420 = arith.mulf %272, %419 : vector<8x128xf32>
    %421 = arith.addf %418, %420 : vector<8x128xf32>
    %422 = vector.broadcast %67 : f32 to vector<8x128xf32>
    %423 = arith.mulf %302, %422 : vector<8x128xf32>
    %424 = arith.addf %421, %423 : vector<8x128xf32>
    %425 = vector.broadcast %68 : f32 to vector<8x128xf32>
    %426 = arith.mulf %332, %425 : vector<8x128xf32>
    %427 = arith.addf %424, %426 : vector<8x128xf32>
    %428 = vector.broadcast %69 : f32 to vector<8x128xf32>
    %429 = arith.mulf %362, %428 : vector<8x128xf32>
    %430 = arith.addf %427, %429 : vector<8x128xf32>
    %431 = vector.broadcast %73 : f32 to vector<8x128xf32>
    %432 = arith.addf %430, %431 : vector<8x128xf32>
    %cst_25 = arith.constant 0.000000e+00 : f32
    %433 = vector.broadcast %cst_25 : f32 to vector<8x128xf32>
    %434 = arith.maximumf %432, %433 : vector<8x128xf32>
    %435 = vector.broadcast %74 : f32 to vector<8x128xf32>
    %436 = arith.mulf %380, %435 : vector<8x128xf32>
    %437 = vector.broadcast %75 : f32 to vector<8x128xf32>
    %438 = arith.mulf %398, %437 : vector<8x128xf32>
    %439 = arith.addf %436, %438 : vector<8x128xf32>
    %440 = vector.broadcast %76 : f32 to vector<8x128xf32>
    %441 = arith.mulf %416, %440 : vector<8x128xf32>
    %442 = arith.addf %439, %441 : vector<8x128xf32>
    %443 = vector.broadcast %77 : f32 to vector<8x128xf32>
    %444 = arith.mulf %434, %443 : vector<8x128xf32>
    %445 = arith.addf %442, %444 : vector<8x128xf32>
    %446 = vector.broadcast %86 : f32 to vector<8x128xf32>
    %447 = arith.addf %445, %446 : vector<8x128xf32>
    %448 = vector.broadcast %78 : f32 to vector<8x128xf32>
    %449 = arith.mulf %380, %448 : vector<8x128xf32>
    %450 = vector.broadcast %79 : f32 to vector<8x128xf32>
    %451 = arith.mulf %398, %450 : vector<8x128xf32>
    %452 = arith.addf %449, %451 : vector<8x128xf32>
    %453 = vector.broadcast %80 : f32 to vector<8x128xf32>
    %454 = arith.mulf %416, %453 : vector<8x128xf32>
    %455 = arith.addf %452, %454 : vector<8x128xf32>
    %456 = vector.broadcast %81 : f32 to vector<8x128xf32>
    %457 = arith.mulf %434, %456 : vector<8x128xf32>
    %458 = arith.addf %455, %457 : vector<8x128xf32>
    %459 = vector.broadcast %87 : f32 to vector<8x128xf32>
    %460 = arith.addf %458, %459 : vector<8x128xf32>
    %461 = vector.broadcast %82 : f32 to vector<8x128xf32>
    %462 = arith.mulf %380, %461 : vector<8x128xf32>
    %463 = vector.broadcast %83 : f32 to vector<8x128xf32>
    %464 = arith.mulf %398, %463 : vector<8x128xf32>
    %465 = arith.addf %462, %464 : vector<8x128xf32>
    %466 = vector.broadcast %84 : f32 to vector<8x128xf32>
    %467 = arith.mulf %416, %466 : vector<8x128xf32>
    %468 = arith.addf %465, %467 : vector<8x128xf32>
    %469 = vector.broadcast %85 : f32 to vector<8x128xf32>
    %470 = arith.mulf %434, %469 : vector<8x128xf32>
    %471 = arith.addf %468, %470 : vector<8x128xf32>
    %472 = vector.broadcast %88 : f32 to vector<8x128xf32>
    %473 = arith.addf %471, %472 : vector<8x128xf32>
    %474 = vector.broadcast %89 : f32 to vector<8x128xf32>
    %475 = arith.mulf %447, %474 : vector<8x128xf32>
    %476 = vector.broadcast %90 : f32 to vector<8x128xf32>
    %477 = arith.mulf %460, %476 : vector<8x128xf32>
    %478 = arith.addf %475, %477 : vector<8x128xf32>
    %479 = vector.broadcast %91 : f32 to vector<8x128xf32>
    %480 = arith.mulf %473, %479 : vector<8x128xf32>
    %481 = arith.addf %478, %480 : vector<8x128xf32>
    %482 = vector.broadcast %101 : f32 to vector<8x128xf32>
    %483 = arith.addf %481, %482 : vector<8x128xf32>
    %cst_26 = arith.constant 0.000000e+00 : f32
    %484 = vector.broadcast %cst_26 : f32 to vector<8x128xf32>
    %485 = arith.maximumf %483, %484 : vector<8x128xf32>
    %486 = vector.broadcast %92 : f32 to vector<8x128xf32>
    %487 = arith.mulf %447, %486 : vector<8x128xf32>
    %488 = vector.broadcast %93 : f32 to vector<8x128xf32>
    %489 = arith.mulf %460, %488 : vector<8x128xf32>
    %490 = arith.addf %487, %489 : vector<8x128xf32>
    %491 = vector.broadcast %94 : f32 to vector<8x128xf32>
    %492 = arith.mulf %473, %491 : vector<8x128xf32>
    %493 = arith.addf %490, %492 : vector<8x128xf32>
    %494 = vector.broadcast %102 : f32 to vector<8x128xf32>
    %495 = arith.addf %493, %494 : vector<8x128xf32>
    %cst_27 = arith.constant 0.000000e+00 : f32
    %496 = vector.broadcast %cst_27 : f32 to vector<8x128xf32>
    %497 = arith.maximumf %495, %496 : vector<8x128xf32>
    %498 = vector.broadcast %95 : f32 to vector<8x128xf32>
    %499 = arith.mulf %447, %498 : vector<8x128xf32>
    %500 = vector.broadcast %96 : f32 to vector<8x128xf32>
    %501 = arith.mulf %460, %500 : vector<8x128xf32>
    %502 = arith.addf %499, %501 : vector<8x128xf32>
    %503 = vector.broadcast %97 : f32 to vector<8x128xf32>
    %504 = arith.mulf %473, %503 : vector<8x128xf32>
    %505 = arith.addf %502, %504 : vector<8x128xf32>
    %506 = vector.broadcast %103 : f32 to vector<8x128xf32>
    %507 = arith.addf %505, %506 : vector<8x128xf32>
    %cst_28 = arith.constant 0.000000e+00 : f32
    %508 = vector.broadcast %cst_28 : f32 to vector<8x128xf32>
    %509 = arith.maximumf %507, %508 : vector<8x128xf32>
    %510 = vector.broadcast %98 : f32 to vector<8x128xf32>
    %511 = arith.mulf %447, %510 : vector<8x128xf32>
    %512 = vector.broadcast %99 : f32 to vector<8x128xf32>
    %513 = arith.mulf %460, %512 : vector<8x128xf32>
    %514 = arith.addf %511, %513 : vector<8x128xf32>
    %515 = vector.broadcast %100 : f32 to vector<8x128xf32>
    %516 = arith.mulf %473, %515 : vector<8x128xf32>
    %517 = arith.addf %514, %516 : vector<8x128xf32>
    %518 = vector.broadcast %104 : f32 to vector<8x128xf32>
    %519 = arith.addf %517, %518 : vector<8x128xf32>
    %cst_29 = arith.constant 0.000000e+00 : f32
    %520 = vector.broadcast %cst_29 : f32 to vector<8x128xf32>
    %521 = arith.maximumf %519, %520 : vector<8x128xf32>
    %522 = vector.broadcast %105 : f32 to vector<8x128xf32>
    %523 = arith.mulf %485, %522 : vector<8x128xf32>
    %524 = vector.broadcast %106 : f32 to vector<8x128xf32>
    %525 = arith.mulf %497, %524 : vector<8x128xf32>
    %526 = arith.addf %523, %525 : vector<8x128xf32>
    %527 = vector.broadcast %107 : f32 to vector<8x128xf32>
    %528 = arith.mulf %509, %527 : vector<8x128xf32>
    %529 = arith.addf %526, %528 : vector<8x128xf32>
    %530 = vector.broadcast %108 : f32 to vector<8x128xf32>
    %531 = arith.mulf %521, %530 : vector<8x128xf32>
    %532 = arith.addf %529, %531 : vector<8x128xf32>
    %533 = vector.broadcast %125 : f32 to vector<8x128xf32>
    %534 = arith.addf %532, %533 : vector<8x128xf32>
    %cst_30 = arith.constant 0.000000e+00 : f32
    %535 = vector.broadcast %cst_30 : f32 to vector<8x128xf32>
    %536 = arith.maximumf %534, %535 : vector<8x128xf32>
    %537 = vector.broadcast %109 : f32 to vector<8x128xf32>
    %538 = arith.mulf %485, %537 : vector<8x128xf32>
    %539 = vector.broadcast %110 : f32 to vector<8x128xf32>
    %540 = arith.mulf %497, %539 : vector<8x128xf32>
    %541 = arith.addf %538, %540 : vector<8x128xf32>
    %542 = vector.broadcast %111 : f32 to vector<8x128xf32>
    %543 = arith.mulf %509, %542 : vector<8x128xf32>
    %544 = arith.addf %541, %543 : vector<8x128xf32>
    %545 = vector.broadcast %112 : f32 to vector<8x128xf32>
    %546 = arith.mulf %521, %545 : vector<8x128xf32>
    %547 = arith.addf %544, %546 : vector<8x128xf32>
    %548 = vector.broadcast %126 : f32 to vector<8x128xf32>
    %549 = arith.addf %547, %548 : vector<8x128xf32>
    %cst_31 = arith.constant 0.000000e+00 : f32
    %550 = vector.broadcast %cst_31 : f32 to vector<8x128xf32>
    %551 = arith.maximumf %549, %550 : vector<8x128xf32>
    %552 = vector.broadcast %113 : f32 to vector<8x128xf32>
    %553 = arith.mulf %485, %552 : vector<8x128xf32>
    %554 = vector.broadcast %114 : f32 to vector<8x128xf32>
    %555 = arith.mulf %497, %554 : vector<8x128xf32>
    %556 = arith.addf %553, %555 : vector<8x128xf32>
    %557 = vector.broadcast %115 : f32 to vector<8x128xf32>
    %558 = arith.mulf %509, %557 : vector<8x128xf32>
    %559 = arith.addf %556, %558 : vector<8x128xf32>
    %560 = vector.broadcast %116 : f32 to vector<8x128xf32>
    %561 = arith.mulf %521, %560 : vector<8x128xf32>
    %562 = arith.addf %559, %561 : vector<8x128xf32>
    %563 = vector.broadcast %127 : f32 to vector<8x128xf32>
    %564 = arith.addf %562, %563 : vector<8x128xf32>
    %cst_32 = arith.constant 0.000000e+00 : f32
    %565 = vector.broadcast %cst_32 : f32 to vector<8x128xf32>
    %566 = arith.maximumf %564, %565 : vector<8x128xf32>
    %567 = vector.broadcast %117 : f32 to vector<8x128xf32>
    %568 = arith.mulf %485, %567 : vector<8x128xf32>
    %569 = vector.broadcast %118 : f32 to vector<8x128xf32>
    %570 = arith.mulf %497, %569 : vector<8x128xf32>
    %571 = arith.addf %568, %570 : vector<8x128xf32>
    %572 = vector.broadcast %119 : f32 to vector<8x128xf32>
    %573 = arith.mulf %509, %572 : vector<8x128xf32>
    %574 = arith.addf %571, %573 : vector<8x128xf32>
    %575 = vector.broadcast %120 : f32 to vector<8x128xf32>
    %576 = arith.mulf %521, %575 : vector<8x128xf32>
    %577 = arith.addf %574, %576 : vector<8x128xf32>
    %578 = vector.broadcast %128 : f32 to vector<8x128xf32>
    %579 = arith.addf %577, %578 : vector<8x128xf32>
    %cst_33 = arith.constant 0.000000e+00 : f32
    %580 = vector.broadcast %cst_33 : f32 to vector<8x128xf32>
    %581 = arith.maximumf %579, %580 : vector<8x128xf32>
    %582 = vector.broadcast %121 : f32 to vector<8x128xf32>
    %583 = arith.mulf %485, %582 : vector<8x128xf32>
    %584 = vector.broadcast %122 : f32 to vector<8x128xf32>
    %585 = arith.mulf %497, %584 : vector<8x128xf32>
    %586 = arith.addf %583, %585 : vector<8x128xf32>
    %587 = vector.broadcast %123 : f32 to vector<8x128xf32>
    %588 = arith.mulf %509, %587 : vector<8x128xf32>
    %589 = arith.addf %586, %588 : vector<8x128xf32>
    %590 = vector.broadcast %124 : f32 to vector<8x128xf32>
    %591 = arith.mulf %521, %590 : vector<8x128xf32>
    %592 = arith.addf %589, %591 : vector<8x128xf32>
    %593 = vector.broadcast %129 : f32 to vector<8x128xf32>
    %594 = arith.addf %592, %593 : vector<8x128xf32>
    %cst_34 = arith.constant 0.000000e+00 : f32
    %595 = vector.broadcast %cst_34 : f32 to vector<8x128xf32>
    %596 = arith.maximumf %594, %595 : vector<8x128xf32>
    %597 = vector.broadcast %130 : f32 to vector<8x128xf32>
    %598 = arith.mulf %536, %597 : vector<8x128xf32>
    %599 = vector.broadcast %131 : f32 to vector<8x128xf32>
    %600 = arith.mulf %551, %599 : vector<8x128xf32>
    %601 = arith.addf %598, %600 : vector<8x128xf32>
    %602 = vector.broadcast %132 : f32 to vector<8x128xf32>
    %603 = arith.mulf %566, %602 : vector<8x128xf32>
    %604 = arith.addf %601, %603 : vector<8x128xf32>
    %605 = vector.broadcast %133 : f32 to vector<8x128xf32>
    %606 = arith.mulf %581, %605 : vector<8x128xf32>
    %607 = arith.addf %604, %606 : vector<8x128xf32>
    %608 = vector.broadcast %134 : f32 to vector<8x128xf32>
    %609 = arith.mulf %596, %608 : vector<8x128xf32>
    %610 = arith.addf %607, %609 : vector<8x128xf32>
    %611 = vector.broadcast %175 : f32 to vector<8x128xf32>
    %612 = arith.addf %610, %611 : vector<8x128xf32>
    %613 = vector.broadcast %135 : f32 to vector<8x128xf32>
    %614 = arith.mulf %536, %613 : vector<8x128xf32>
    %615 = vector.broadcast %136 : f32 to vector<8x128xf32>
    %616 = arith.mulf %551, %615 : vector<8x128xf32>
    %617 = arith.addf %614, %616 : vector<8x128xf32>
    %618 = vector.broadcast %137 : f32 to vector<8x128xf32>
    %619 = arith.mulf %566, %618 : vector<8x128xf32>
    %620 = arith.addf %617, %619 : vector<8x128xf32>
    %621 = vector.broadcast %138 : f32 to vector<8x128xf32>
    %622 = arith.mulf %581, %621 : vector<8x128xf32>
    %623 = arith.addf %620, %622 : vector<8x128xf32>
    %624 = vector.broadcast %139 : f32 to vector<8x128xf32>
    %625 = arith.mulf %596, %624 : vector<8x128xf32>
    %626 = arith.addf %623, %625 : vector<8x128xf32>
    %627 = vector.broadcast %176 : f32 to vector<8x128xf32>
    %628 = arith.addf %626, %627 : vector<8x128xf32>
    %629 = vector.broadcast %140 : f32 to vector<8x128xf32>
    %630 = arith.mulf %536, %629 : vector<8x128xf32>
    %631 = vector.broadcast %141 : f32 to vector<8x128xf32>
    %632 = arith.mulf %551, %631 : vector<8x128xf32>
    %633 = arith.addf %630, %632 : vector<8x128xf32>
    %634 = vector.broadcast %142 : f32 to vector<8x128xf32>
    %635 = arith.mulf %566, %634 : vector<8x128xf32>
    %636 = arith.addf %633, %635 : vector<8x128xf32>
    %637 = vector.broadcast %143 : f32 to vector<8x128xf32>
    %638 = arith.mulf %581, %637 : vector<8x128xf32>
    %639 = arith.addf %636, %638 : vector<8x128xf32>
    %640 = vector.broadcast %144 : f32 to vector<8x128xf32>
    %641 = arith.mulf %596, %640 : vector<8x128xf32>
    %642 = arith.addf %639, %641 : vector<8x128xf32>
    %643 = vector.broadcast %177 : f32 to vector<8x128xf32>
    %644 = arith.addf %642, %643 : vector<8x128xf32>
    %645 = vector.broadcast %145 : f32 to vector<8x128xf32>
    %646 = arith.mulf %536, %645 : vector<8x128xf32>
    %647 = vector.broadcast %146 : f32 to vector<8x128xf32>
    %648 = arith.mulf %551, %647 : vector<8x128xf32>
    %649 = arith.addf %646, %648 : vector<8x128xf32>
    %650 = vector.broadcast %147 : f32 to vector<8x128xf32>
    %651 = arith.mulf %566, %650 : vector<8x128xf32>
    %652 = arith.addf %649, %651 : vector<8x128xf32>
    %653 = vector.broadcast %148 : f32 to vector<8x128xf32>
    %654 = arith.mulf %581, %653 : vector<8x128xf32>
    %655 = arith.addf %652, %654 : vector<8x128xf32>
    %656 = vector.broadcast %149 : f32 to vector<8x128xf32>
    %657 = arith.mulf %596, %656 : vector<8x128xf32>
    %658 = arith.addf %655, %657 : vector<8x128xf32>
    %659 = vector.broadcast %178 : f32 to vector<8x128xf32>
    %660 = arith.addf %658, %659 : vector<8x128xf32>
    %661 = vector.broadcast %150 : f32 to vector<8x128xf32>
    %662 = arith.mulf %536, %661 : vector<8x128xf32>
    %663 = vector.broadcast %151 : f32 to vector<8x128xf32>
    %664 = arith.mulf %551, %663 : vector<8x128xf32>
    %665 = arith.addf %662, %664 : vector<8x128xf32>
    %666 = vector.broadcast %152 : f32 to vector<8x128xf32>
    %667 = arith.mulf %566, %666 : vector<8x128xf32>
    %668 = arith.addf %665, %667 : vector<8x128xf32>
    %669 = vector.broadcast %153 : f32 to vector<8x128xf32>
    %670 = arith.mulf %581, %669 : vector<8x128xf32>
    %671 = arith.addf %668, %670 : vector<8x128xf32>
    %672 = vector.broadcast %154 : f32 to vector<8x128xf32>
    %673 = arith.mulf %596, %672 : vector<8x128xf32>
    %674 = arith.addf %671, %673 : vector<8x128xf32>
    %675 = vector.broadcast %179 : f32 to vector<8x128xf32>
    %676 = arith.addf %674, %675 : vector<8x128xf32>
    %677 = vector.broadcast %155 : f32 to vector<8x128xf32>
    %678 = arith.mulf %536, %677 : vector<8x128xf32>
    %679 = vector.broadcast %156 : f32 to vector<8x128xf32>
    %680 = arith.mulf %551, %679 : vector<8x128xf32>
    %681 = arith.addf %678, %680 : vector<8x128xf32>
    %682 = vector.broadcast %157 : f32 to vector<8x128xf32>
    %683 = arith.mulf %566, %682 : vector<8x128xf32>
    %684 = arith.addf %681, %683 : vector<8x128xf32>
    %685 = vector.broadcast %158 : f32 to vector<8x128xf32>
    %686 = arith.mulf %581, %685 : vector<8x128xf32>
    %687 = arith.addf %684, %686 : vector<8x128xf32>
    %688 = vector.broadcast %159 : f32 to vector<8x128xf32>
    %689 = arith.mulf %596, %688 : vector<8x128xf32>
    %690 = arith.addf %687, %689 : vector<8x128xf32>
    %691 = vector.broadcast %180 : f32 to vector<8x128xf32>
    %692 = arith.addf %690, %691 : vector<8x128xf32>
    %693 = vector.broadcast %160 : f32 to vector<8x128xf32>
    %694 = arith.mulf %536, %693 : vector<8x128xf32>
    %695 = vector.broadcast %161 : f32 to vector<8x128xf32>
    %696 = arith.mulf %551, %695 : vector<8x128xf32>
    %697 = arith.addf %694, %696 : vector<8x128xf32>
    %698 = vector.broadcast %162 : f32 to vector<8x128xf32>
    %699 = arith.mulf %566, %698 : vector<8x128xf32>
    %700 = arith.addf %697, %699 : vector<8x128xf32>
    %701 = vector.broadcast %163 : f32 to vector<8x128xf32>
    %702 = arith.mulf %581, %701 : vector<8x128xf32>
    %703 = arith.addf %700, %702 : vector<8x128xf32>
    %704 = vector.broadcast %164 : f32 to vector<8x128xf32>
    %705 = arith.mulf %596, %704 : vector<8x128xf32>
    %706 = arith.addf %703, %705 : vector<8x128xf32>
    %707 = vector.broadcast %181 : f32 to vector<8x128xf32>
    %708 = arith.addf %706, %707 : vector<8x128xf32>
    %709 = vector.broadcast %165 : f32 to vector<8x128xf32>
    %710 = arith.mulf %536, %709 : vector<8x128xf32>
    %711 = vector.broadcast %166 : f32 to vector<8x128xf32>
    %712 = arith.mulf %551, %711 : vector<8x128xf32>
    %713 = arith.addf %710, %712 : vector<8x128xf32>
    %714 = vector.broadcast %167 : f32 to vector<8x128xf32>
    %715 = arith.mulf %566, %714 : vector<8x128xf32>
    %716 = arith.addf %713, %715 : vector<8x128xf32>
    %717 = vector.broadcast %168 : f32 to vector<8x128xf32>
    %718 = arith.mulf %581, %717 : vector<8x128xf32>
    %719 = arith.addf %716, %718 : vector<8x128xf32>
    %720 = vector.broadcast %169 : f32 to vector<8x128xf32>
    %721 = arith.mulf %596, %720 : vector<8x128xf32>
    %722 = arith.addf %719, %721 : vector<8x128xf32>
    %723 = vector.broadcast %182 : f32 to vector<8x128xf32>
    %724 = arith.addf %722, %723 : vector<8x128xf32>
    %725 = vector.broadcast %170 : f32 to vector<8x128xf32>
    %726 = arith.mulf %536, %725 : vector<8x128xf32>
    %727 = vector.broadcast %171 : f32 to vector<8x128xf32>
    %728 = arith.mulf %551, %727 : vector<8x128xf32>
    %729 = arith.addf %726, %728 : vector<8x128xf32>
    %730 = vector.broadcast %172 : f32 to vector<8x128xf32>
    %731 = arith.mulf %566, %730 : vector<8x128xf32>
    %732 = arith.addf %729, %731 : vector<8x128xf32>
    %733 = vector.broadcast %173 : f32 to vector<8x128xf32>
    %734 = arith.mulf %581, %733 : vector<8x128xf32>
    %735 = arith.addf %732, %734 : vector<8x128xf32>
    %736 = vector.broadcast %174 : f32 to vector<8x128xf32>
    %737 = arith.mulf %596, %736 : vector<8x128xf32>
    %738 = arith.addf %735, %737 : vector<8x128xf32>
    %739 = vector.broadcast %183 : f32 to vector<8x128xf32>
    %740 = arith.addf %738, %739 : vector<8x128xf32>
    %c0_35 = arith.constant 0 : index
    %741 = arith.index_cast %185 : i32 to index
    %c0_36 = arith.constant 0 : index
    %742 = vector.load %arg3[%c0_35, %741, %c0_36] : memref<3x8x128xf32, #tpu.memory_space<vmem>>, vector<1x8x128xf32>
    %743 = vector.shape_cast %742 : vector<1x8x128xf32> to vector<8x128xf32>
    %744 = vector.shape_cast %447 : vector<8x128xf32> to vector<1x8x128xf32>
    tpu.vector_store %arg3[%c0_35, %741, %c0_36], %744 {strides = array<i32>} : memref<3x8x128xf32, #tpu.memory_space<vmem>>, vector<1x8x128xf32>,
    %c1_37 = arith.constant 1 : index
    %745 = arith.index_cast %185 : i32 to index
    %c0_38 = arith.constant 0 : index
    %746 = vector.load %arg3[%c1_37, %745, %c0_38] : memref<3x8x128xf32, #tpu.memory_space<vmem>>, vector<1x8x128xf32>
    %747 = vector.shape_cast %746 : vector<1x8x128xf32> to vector<8x128xf32>
    %748 = vector.shape_cast %460 : vector<8x128xf32> to vector<1x8x128xf32>
    tpu.vector_store %arg3[%c1_37, %745, %c0_38], %748 {strides = array<i32>} : memref<3x8x128xf32, #tpu.memory_space<vmem>>, vector<1x8x128xf32>,
    %c2_39 = arith.constant 2 : index
    %749 = arith.index_cast %185 : i32 to index
    %c0_40 = arith.constant 0 : index
    %750 = vector.load %arg3[%c2_39, %749, %c0_40] : memref<3x8x128xf32, #tpu.memory_space<vmem>>, vector<1x8x128xf32>
    %751 = vector.shape_cast %750 : vector<1x8x128xf32> to vector<8x128xf32>
    %752 = vector.shape_cast %473 : vector<8x128xf32> to vector<1x8x128xf32>
    tpu.vector_store %arg3[%c2_39, %749, %c0_40], %752 {strides = array<i32>} : memref<3x8x128xf32, #tpu.memory_space<vmem>>, vector<1x8x128xf32>,
    %c0_41 = arith.constant 0 : index
    %753 = arith.index_cast %185 : i32 to index
    %c0_42 = arith.constant 0 : index
    %754 = vector.load %arg4[%c0_41, %753, %c0_42] : memref<9x8x128xf32, #tpu.memory_space<vmem>>, vector<1x8x128xf32>
    %755 = vector.shape_cast %754 : vector<1x8x128xf32> to vector<8x128xf32>
    %756 = vector.shape_cast %612 : vector<8x128xf32> to vector<1x8x128xf32>
    tpu.vector_store %arg4[%c0_41, %753, %c0_42], %756 {strides = array<i32>} : memref<9x8x128xf32, #tpu.memory_space<vmem>>, vector<1x8x128xf32>,
    %c1_43 = arith.constant 1 : index
    %757 = arith.index_cast %185 : i32 to index
    %c0_44 = arith.constant 0 : index
    %758 = vector.load %arg4[%c1_43, %757, %c0_44] : memref<9x8x128xf32, #tpu.memory_space<vmem>>, vector<1x8x128xf32>
    %759 = vector.shape_cast %758 : vector<1x8x128xf32> to vector<8x128xf32>
    %760 = vector.shape_cast %628 : vector<8x128xf32> to vector<1x8x128xf32>
    tpu.vector_store %arg4[%c1_43, %757, %c0_44], %760 {strides = array<i32>} : memref<9x8x128xf32, #tpu.memory_space<vmem>>, vector<1x8x128xf32>,
    %c2_45 = arith.constant 2 : index
    %761 = arith.index_cast %185 : i32 to index
    %c0_46 = arith.constant 0 : index
    %762 = vector.load %arg4[%c2_45, %761, %c0_46] : memref<9x8x128xf32, #tpu.memory_space<vmem>>, vector<1x8x128xf32>
    %763 = vector.shape_cast %762 : vector<1x8x128xf32> to vector<8x128xf32>
    %764 = vector.shape_cast %644 : vector<8x128xf32> to vector<1x8x128xf32>
    tpu.vector_store %arg4[%c2_45, %761, %c0_46], %764 {strides = array<i32>} : memref<9x8x128xf32, #tpu.memory_space<vmem>>, vector<1x8x128xf32>,
    %c3_47 = arith.constant 3 : index
    %765 = arith.index_cast %185 : i32 to index
    %c0_48 = arith.constant 0 : index
    %766 = vector.load %arg4[%c3_47, %765, %c0_48] : memref<9x8x128xf32, #tpu.memory_space<vmem>>, vector<1x8x128xf32>
    %767 = vector.shape_cast %766 : vector<1x8x128xf32> to vector<8x128xf32>
    %768 = vector.shape_cast %660 : vector<8x128xf32> to vector<1x8x128xf32>
    tpu.vector_store %arg4[%c3_47, %765, %c0_48], %768 {strides = array<i32>} : memref<9x8x128xf32, #tpu.memory_space<vmem>>, vector<1x8x128xf32>,
    %c4_49 = arith.constant 4 : index
    %769 = arith.index_cast %185 : i32 to index
    %c0_50 = arith.constant 0 : index
    %770 = vector.load %arg4[%c4_49, %769, %c0_50] : memref<9x8x128xf32, #tpu.memory_space<vmem>>, vector<1x8x128xf32>
    %771 = vector.shape_cast %770 : vector<1x8x128xf32> to vector<8x128xf32>
    %772 = vector.shape_cast %676 : vector<8x128xf32> to vector<1x8x128xf32>
    tpu.vector_store %arg4[%c4_49, %769, %c0_50], %772 {strides = array<i32>} : memref<9x8x128xf32, #tpu.memory_space<vmem>>, vector<1x8x128xf32>,
    %c5_51 = arith.constant 5 : index
    %773 = arith.index_cast %185 : i32 to index
    %c0_52 = arith.constant 0 : index
    %774 = vector.load %arg4[%c5_51, %773, %c0_52] : memref<9x8x128xf32, #tpu.memory_space<vmem>>, vector<1x8x128xf32>
    %775 = vector.shape_cast %774 : vector<1x8x128xf32> to vector<8x128xf32>
    %776 = vector.shape_cast %692 : vector<8x128xf32> to vector<1x8x128xf32>
    tpu.vector_store %arg4[%c5_51, %773, %c0_52], %776 {strides = array<i32>} : memref<9x8x128xf32, #tpu.memory_space<vmem>>, vector<1x8x128xf32>,
    %c6_53 = arith.constant 6 : index
    %777 = arith.index_cast %185 : i32 to index
    %c0_54 = arith.constant 0 : index
    %778 = vector.load %arg4[%c6_53, %777, %c0_54] : memref<9x8x128xf32, #tpu.memory_space<vmem>>, vector<1x8x128xf32>
    %779 = vector.shape_cast %778 : vector<1x8x128xf32> to vector<8x128xf32>
    %780 = vector.shape_cast %708 : vector<8x128xf32> to vector<1x8x128xf32>
    tpu.vector_store %arg4[%c6_53, %777, %c0_54], %780 {strides = array<i32>} : memref<9x8x128xf32, #tpu.memory_space<vmem>>, vector<1x8x128xf32>,
    %c7_55 = arith.constant 7 : index
    %781 = arith.index_cast %185 : i32 to index
    %c0_56 = arith.constant 0 : index
    %782 = vector.load %arg4[%c7_55, %781, %c0_56] : memref<9x8x128xf32, #tpu.memory_space<vmem>>, vector<1x8x128xf32>
    %783 = vector.shape_cast %782 : vector<1x8x128xf32> to vector<8x128xf32>
    %784 = vector.shape_cast %724 : vector<8x128xf32> to vector<1x8x128xf32>
    tpu.vector_store %arg4[%c7_55, %781, %c0_56], %784 {strides = array<i32>} : memref<9x8x128xf32, #tpu.memory_space<vmem>>, vector<1x8x128xf32>,
    %c8_57 = arith.constant 8 : index
    %785 = arith.index_cast %185 : i32 to index
    %c0_58 = arith.constant 0 : index
    %786 = vector.load %arg4[%c8_57, %785, %c0_58] : memref<9x8x128xf32, #tpu.memory_space<vmem>>, vector<1x8x128xf32>
    %787 = vector.shape_cast %786 : vector<1x8x128xf32> to vector<8x128xf32>
    %788 = vector.shape_cast %740 : vector<8x128xf32> to vector<1x8x128xf32>
    tpu.vector_store %arg4[%c8_57, %785, %c0_58], %788 {strides = array<i32>} : memref<9x8x128xf32, #tpu.memory_space<vmem>>, vector<1x8x128xf32>,
    %c1_i32 = arith.constant 1 : i32
    return
  }
  func.func @transform_0(%arg0: i32) -> (i32, i32, i32) {
    %c0_i32 = arith.constant 0 : i32
    %c0_i32_0 = arith.constant 0 : i32
    %c0_i32_1 = arith.constant 0 : i32
    return %c0_i32, %arg0, %c0_i32_0 : i32, i32, i32
  }
  func.func @transform_1(%arg0: i32) -> i32 {
    %c0_i32 = arith.constant 0 : i32
    %c0_i32_0 = arith.constant 0 : i32
    return %c0_i32 : i32
  }
  func.func @transform_2(%arg0: i32) -> (i32, i32, i32) {
    %c0_i32 = arith.constant 0 : i32
    %c0_i32_0 = arith.constant 0 : i32
    %c0_i32_1 = arith.constant 0 : i32
    return %c0_i32, %arg0, %c0_i32_0 : i32, i32, i32
  }
  func.func @transform_3(%arg0: i32) -> (i32, i32, i32) {
    %c0_i32 = arith.constant 0 : i32
    %c0_i32_0 = arith.constant 0 : i32
    %c0_i32_1 = arith.constant 0 : i32
    return %c0_i32, %arg0, %c0_i32_0 : i32, i32, i32
  }
}

</mosaic_0001>

<llo_original>
// kernel: autocoder_forward.1
$region0: #{autocoder_forward.1}
  #allocation0 [shape = 'u32[]', space=smem, size = 0x4, offset = 0x4, fixed_abs, tag = 'smem constant byte address 0x4 - core index']
  #allocation1 [shape = 'u32[72,128]{1,0:T(1,128)}', space=vmem, size = 0x9000, scoped, tag = 'internal scratch']
  %s0 = inlined_call_operand.vmem [shape: f32[9,8,128], index: 0, kind: input, shape index: {}]
  %s1 = inlined_call_operand.vmem [shape: f32[184], index: 1, kind: input, shape index: {}]
  %s2 = inlined_call_operand.vmem [shape: f32[3,8,128], index: 2, kind: output, shape index: {0}]
  %s3 = inlined_call_operand.vmem [shape: f32[9,8,128], index: 3, kind: output, shape index: {1}]
  %4 = xla_tuple %s2, %s3
  %s5 = sld [smem:[#allocation0]]
  $region30: #{autocoder_forward.1} parent=0
    _
  %s7 = ssub.s32 1, %s5
  %s8 = scalar_select 0, %s7, %s5
  $region1: #{autocoder_forward.1} parent=0
    #allocation2 [shape = 'u8[1024]{0}', space=smem, size = 0x400, scoped, tag = 'input window, operand 1, single buffered']
    #allocation3 [shape = 's32[1]{0}', space=sflag, size = 0x4, scoped, tag = 'scoped memory for autocoder_forward.1']
    %9 = vsyncpa [#allocation3], 0
    // Predicated region
    $region2: #{autocoder_forward.1} parent=1 // pred_check
      _
    $region3: #{autocoder_forward.1} parent=1 // pred_check_branch
      %11 = sbr.rel (0) target = $region5
    $region4: #{autocoder_forward.1} parent=1 // pred_region
      _
    $region5: #{autocoder_forward.1} parent=1 // pred_fallthru
      _
    // Predicated region
    $region6: #{autocoder_forward.1} parent=1 // pred_check
      _
    $region7: #{autocoder_forward.1} parent=1 // pred_check_branch
      %13 = sbr.rel (0) target = $region9
    $region8: #{autocoder_forward.1} parent=1 // pred_region
      %15 = vsyncadd [#allocation3], 0
      %s17 = sshll.u32 %s1, 4
      %s18 = int_to_ptr.vmem [resolvable:$true] %s17
      %20 = dma.vmem_to_smem %s18, 32, [#allocation2], [#allocation3]
    $region9: #{autocoder_forward.1} parent=1 // pred_fallthru
      _
    // Predicated region
    $region10: #{autocoder_forward.1} parent=1 // pred_check
      _
    $region11: #{autocoder_forward.1} parent=1 // pred_check_branch
      %22 = sbr.rel (0) target = $region13
    $region12: #{autocoder_forward.1} parent=1 // pred_region
      %24 = dma.done [#allocation3], 32
    $region13: #{autocoder_forward.1} parent=1 // pred_fallthru
      _
    %25 = sfence
    %s26 = sld [smem:[#allocation2]]
    %s27 = sld [smem:[#allocation2 + $0x1]]
    %s28 = sld [smem:[#allocation2 + $0x2]]
    %s29 = sld [smem:[#allocation2 + $0x3]]
    %s30 = sld [smem:[#allocation2 + $0x4]]
    %s31 = sld [smem:[#allocation2 + $0x5]]
    %s32 = sld [smem:[#allocation2 + $0x6]]
    %s33 = sld [smem:[#allocation2 + $0x7]]
    %s34 = sld [smem:[#allocation2 + $0x8]]
    %s35 = sld [smem:[#allocation2 + $0x9]]
    %s36 = sld [smem:[#allocation2 + $0xa]]
    %s37 = sld [smem:[#allocation2 + $0xb]]
    %s38 = sld [smem:[#allocation2 + $0xc]]
    %s39 = sld [smem:[#allocation2 + $0xd]]
    %s40 = sld [smem:[#allocation2 + $0xe]]
    %s41 = sld [smem:[#allocation2 + $0xf]]
    %s42 = sld [smem:[#allocation2 + $0x10]]
    %s43 = sld [smem:[#allocation2 + $0x11]]
    %s44 = sld [smem:[#allocation2 + $0x12]]
    %s45 = sld [smem:[#allocation2 + $0x13]]
    %s46 = sld [smem:[#allocation2 + $0x14]]
    %s47 = sld [smem:[#allocation2 + $0x15]]
    %s48 = sld [smem:[#allocation2 + $0x16]]
    %s49 = sld [smem:[#allocation2 + $0x17]]
    %s50 = sld [smem:[#allocation2 + $0x18]]
    %s51 = sld [smem:[#allocation2 + $0x19]]
    %s52 = sld [smem:[#allocation2 + $0x1a]]
    %s53 = sld [smem:[#allocation2 + $0x1b]]
    %s54 = sld [smem:[#allocation2 + $0x1c]]
    %s55 = sld [smem:[#allocation2 + $0x1d]]
    %s56 = sld [smem:[#allocation2 + $0x1e]]
    %s57 = sld [smem:[#allocation2 + $0x1f]]
    %s58 = sld [smem:[#allocation2 + $0x20]]
    %s59 = sld [smem:[#allocation2 + $0x21]]
    %s60 = sld [smem:[#allocation2 + $0x22]]
    %s61 = sld [smem:[#allocation2 + $0x23]]
    %s62 = sld [smem:[#allocation2 + $0x24]]
    %s63 = sld [smem:[#allocation2 + $0x25]]
    %s64 = sld [smem:[#allocation2 + $0x26]]
    %s65 = sld [smem:[#allocation2 + $0x27]]
    %s66 = sld [smem:[#allocation2 + $0x28]]
    %s67 = sld [smem:[#allocation2 + $0x29]]
    %s68 = sld [smem:[#allocation2 + $0x2a]]
    %s69 = sld [smem:[#allocation2 + $0x2b]]
    %s70 = sld [smem:[#allocation2 + $0x2c]]
    %s71 = sld [smem:[#allocation2 + $0x2d]]
    %s72 = sld [smem:[#allocation2 + $0x2e]]
    %s73 = sld [smem:[#allocation2 + $0x2f]]
    %s74 = sld [smem:[#allocation2 + $0x30]]
    %s75 = sld [smem:[#allocation2 + $0x31]]
    %s76 = sld [smem:[#allocation2 + $0x32]]
    %s77 = sld [smem:[#allocation2 + $0x33]]
    %s78 = sld [smem:[#allocation2 + $0x34]]
    %s79 = sld [smem:[#allocation2 + $0x35]]
    %s80 = sld [smem:[#allocation2 + $0x36]]
    %s81 = sld [smem:[#allocation2 + $0x37]]
    %s82 = sld [smem:[#allocation2 + $0x38]]
    %s83 = sld [smem:[#allocation2 + $0x39]]
    %s84 = sld [smem:[#allocation2 + $0x3a]]
    %s85 = sld [smem:[#allocation2 + $0x3b]]
    %s86 = sld [smem:[#allocation2 + $0x3c]]
    %s87 = sld [smem:[#allocation2 + $0x3d]]
    %s88 = sld [smem:[#allocation2 + $0x3e]]
    %s89 = sld [smem:[#allocation2 + $0x3f]]
    %s90 = sld [smem:[#allocation2 + $0x40]]
    %s91 = sld [smem:[#allocation2 + $0x41]]
    %s92 = sld [smem:[#allocation2 + $0x42]]
    %s93 = sld [smem:[#allocation2 + $0x43]]
    %s94 = sld [smem:[#allocation2 + $0x44]]
    %s95 = sld [smem:[#allocation2 + $0x45]]
    %s96 = sld [smem:[#allocation2 + $0x46]]
    %s97 = sld [smem:[#allocation2 + $0x47]]
    %s98 = sld [smem:[#allocation2 + $0x48]]
    %s99 = sld [smem:[#allocation2 + $0x49]]
    %s100 = sld [smem:[#allocation2 + $0x4a]]
    %s101 = sld [smem:[#allocation2 + $0x4b]]
    %s102 = sld [smem:[#allocation2 + $0x4c]]
    %s103 = sld [smem:[#allocation2 + $0x4d]]
    %s104 = sld [smem:[#allocation2 + $0x4e]]
    %s105 = sld [smem:[#allocation2 + $0x4f]]
    %s106 = sld [smem:[#allocation2 + $0x50]]
    %s107 = sld [smem:[#allocation2 + $0x51]]
    %s108 = sld [smem:[#allocation2 + $0x52]]
    %s109 = sld [smem:[#allocation2 + $0x53]]
    %s110 = sld [smem:[#allocation2 + $0x54]]
    %s111 = sld [smem:[#allocation2 + $0x55]]
    %s112 = sld [smem:[#allocation2 + $0x56]]
    %s113 = sld [smem:[#allocation2 + $0x57]]
    %s114 = sld [smem:[#allocation2 + $0x58]]
    %s115 = sld [smem:[#allocation2 + $0x59]]
    %s116 = sld [smem:[#allocation2 + $0x5a]]
    %s117 = sld [smem:[#allocation2 + $0x5b]]
    %s118 = sld [smem:[#allocation2 + $0x5c]]
    %s119 = sld [smem:[#allocation2 + $0x5d]]
    %s120 = sld [smem:[#allocation2 + $0x5e]]
    %s121 = sld [smem:[#allocation2 + $0x5f]]
    %s122 = sld [smem:[#allocation2 + $0x60]]
    %s123 = sld [smem:[#allocation2 + $0x61]]
    %s124 = sld [smem:[#allocation2 + $0x62]]
    %s125 = sld [smem:[#allocation2 + $0x63]]
    %s126 = sld [smem:[#allocation2 + $0x64]]
    %s127 = sld [smem:[#allocation2 + $0x65]]
    %s128 = sld [smem:[#allocation2 + $0x66]]
    %s129 = sld [smem:[#allocation2 + $0x67]]
    %s130 = sld [smem:[#allocation2 + $0x68]]
    %s131 = sld [smem:[#allocation2 + $0x69]]
    %s132 = sld [smem:[#allocation2 + $0x6a]]
    %s133 = sld [smem:[#allocation2 + $0x6b]]
    %s134 = sld [smem:[#allocation2 + $0x6c]]
    %s135 = sld [smem:[#allocation2 + $0x6d]]
    %s136 = sld [smem:[#allocation2 + $0x6e]]
    %s137 = sld [smem:[#allocation2 + $0x6f]]
    %s138 = sld [smem:[#allocation2 + $0x70]]
    %s139 = sld [smem:[#allocation2 + $0x71]]
    %s140 = sld [smem:[#allocation2 + $0x72]]
    %s141 = sld [smem:[#allocation2 + $0x73]]
    %s142 = sld [smem:[#allocation2 + $0x74]]
    %s143 = sld [smem:[#allocation2 + $0x75]]
    %s144 = sld [smem:[#allocation2 + $0x76]]
    %s145 = sld [smem:[#allocation2 + $0x77]]
    %s146 = sld [smem:[#allocation2 + $0x78]]
    %s147 = sld [smem:[#allocation2 + $0x79]]
    %s148 = sld [smem:[#allocation2 + $0x7a]]
    %s149 = sld [smem:[#allocation2 + $0x7b]]
    %s150 = sld [smem:[#allocation2 + $0x7c]]
    %s151 = sld [smem:[#allocation2 + $0x7d]]
    %s152 = sld [smem:[#allocation2 + $0x7e]]
    %s153 = sld [smem:[#allocation2 + $0x7f]]
    %s154 = sld [smem:[#allocation2 + $0x80]]
    %s155 = sld [smem:[#allocation2 + $0x81]]
    %s156 = sld [smem:[#allocation2 + $0x82]]
    %s157 = sld [smem:[#allocation2 + $0x83]]
    %s158 = sld [smem:[#allocation2 + $0x84]]
    %s159 = sld [smem:[#allocation2 + $0x85]]
    %s160 = sld [smem:[#allocation2 + $0x86]]
    %s161 = sld [smem:[#allocation2 + $0x87]]
    %s162 = sld [smem:[#allocation2 + $0x88]]
    %s163 = sld [smem:[#allocation2 + $0x89]]
    %s164 = sld [smem:[#allocation2 + $0x8a]]
    %s165 = sld [smem:[#allocation2 + $0x8b]]
    %s166 = sld [smem:[#allocation2 + $0x8c]]
    %s167 = sld [smem:[#allocation2 + $0x8d]]
    %s168 = sld [smem:[#allocation2 + $0x8e]]
    %s169 = sld [smem:[#allocation2 + $0x8f]]
    %s170 = sld [smem:[#allocation2 + $0x90]]
    %s171 = sld [smem:[#allocation2 + $0x91]]
    %s172 = sld [smem:[#allocation2 + $0x92]]
    %s173 = sld [smem:[#allocation2 + $0x93]]
    %s174 = sld [smem:[#allocation2 + $0x94]]
    %s175 = sld [smem:[#allocation2 + $0x95]]
    %s176 = sld [smem:[#allocation2 + $0x96]]
    %s177 = sld [smem:[#allocation2 + $0x97]]
    %s178 = sld [smem:[#allocation2 + $0x98]]
    %s179 = sld [smem:[#allocation2 + $0x99]]
    %s180 = sld [smem:[#allocation2 + $0x9a]]
    %s181 = sld [smem:[#allocation2 + $0x9b]]
    %s182 = sld [smem:[#allocation2 + $0x9c]]
    %s183 = sld [smem:[#allocation2 + $0x9d]]
    %s184 = sld [smem:[#allocation2 + $0x9e]]
    %s185 = sld [smem:[#allocation2 + $0x9f]]
    %s186 = sld [smem:[#allocation2 + $0xa0]]
    %s187 = sld [smem:[#allocation2 + $0xa1]]
    %s188 = sld [smem:[#allocation2 + $0xa2]]
    %s189 = sld [smem:[#allocation2 + $0xa3]]
    %s190 = sld [smem:[#allocation2 + $0xa4]]
    %s191 = sld [smem:[#allocation2 + $0xa5]]
    %s192 = sld [smem:[#allocation2 + $0xa6]]
    %s193 = sld [smem:[#allocation2 + $0xa7]]
    %s194 = sld [smem:[#allocation2 + $0xa8]]
    %s195 = sld [smem:[#allocation2 + $0xa9]]
    %s196 = sld [smem:[#allocation2 + $0xaa]]
    %s197 = sld [smem:[#allocation2 + $0xab]]
    %s198 = sld [smem:[#allocation2 + $0xac]]
    %s199 = sld [smem:[#allocation2 + $0xad]]
    %s200 = sld [smem:[#allocation2 + $0xae]]
    %s201 = sld [smem:[#allocation2 + $0xaf]]
    %s202 = sld [smem:[#allocation2 + $0xb0]]
    %s203 = sld [smem:[#allocation2 + $0xb1]]
    %s204 = sld [smem:[#allocation2 + $0xb2]]
    %s205 = sld [smem:[#allocation2 + $0xb3]]
    %s206 = sld [smem:[#allocation2 + $0xb4]]
    %s207 = sld [smem:[#allocation2 + $0xb5]]
    %s208 = sld [smem:[#allocation2 + $0xb6]]
    %s209 = sld [smem:[#allocation2 + $0xb7]]
    %v210 = vld [vmem:[%s0] sm:$0xff]
    %s211 = sadd.s32 0, 8
    %s212 = scalar_lea.vmem %s0, %s211
    %v213 = vld [vmem:[%s212] sm:$0xff]
    %s214 = sadd.s32 0, 16
    %s215 = scalar_lea.vmem %s0, %s214
    %v216 = vld [vmem:[%s215] sm:$0xff]
    %s217 = sadd.s32 0, 24
    %s218 = scalar_lea.vmem %s0, %s217
    %v219 = vld [vmem:[%s218] sm:$0xff]
    %s220 = sadd.s32 0, 32
    %s221 = scalar_lea.vmem %s0, %s220
    %v222 = vld [vmem:[%s221] sm:$0xff]
    %s223 = sadd.s32 0, 40
    %s224 = scalar_lea.vmem %s0, %s223
    %v225 = vld [vmem:[%s224] sm:$0xff]
    %s226 = sadd.s32 0, 48
    %s227 = scalar_lea.vmem %s0, %s226
    %v228 = vld [vmem:[%s227] sm:$0xff]
    %s229 = sadd.s32 0, 56
    %s230 = scalar_lea.vmem %s0, %s229
    %v231 = vld [vmem:[%s230] sm:$0xff]
    %s232 = sadd.s32 0, 64
    %s233 = scalar_lea.vmem %s0, %s232
    %v234 = vld [vmem:[%s233] sm:$0xff]
    %v235 = vstv %s26
    %v236 = vmul.f32 %v210, %v235
    %v237 = vstv %s27
    %v238 = vmul.f32 %v213, %v237
    %v239 = vadd.f32 %v236, %v238
    %v240 = vstv %s28
    %v241 = vmul.f32 %v216, %v240
    %v242 = vadd.f32 %v239, %v241
    %v243 = vstv %s29
    %v244 = vmul.f32 %v219, %v243
    %v245 = vadd.f32 %v242, %v244
    %v246 = vstv %s30
    %v247 = vmul.f32 %v222, %v246
    %v248 = vadd.f32 %v245, %v247
    %v249 = vstv %s31
    %v250 = vmul.f32 %v225, %v249
    %v251 = vadd.f32 %v248, %v250
    %v252 = vstv %s32
    %v253 = vmul.f32 %v228, %v252
    %v254 = vadd.f32 %v251, %v253
    %v255 = vstv %s33
    %v256 = vmul.f32 %v231, %v255
    %v257 = vadd.f32 %v254, %v256
    %v258 = vstv %s34
    %v259 = vmul.f32 %v234, %v258
    %v260 = vadd.f32 %v257, %v259
    %v261 = vstv %s71
    %v262 = vadd.f32 %v260, %v261
    %v263 = vmax.f32 %v262, 0.0
    %v264 = vstv %s35
    %v265 = vmul.f32 %v210, %v264
    %v266 = vstv %s36
    %v267 = vmul.f32 %v213, %v266
    %v268 = vadd.f32 %v265, %v267
    %v269 = vstv %s37
    %v270 = vmul.f32 %v216, %v269
    %v271 = vadd.f32 %v268, %v270
    %v272 = vstv %s38
    %v273 = vmul.f32 %v219, %v272
    %v274 = vadd.f32 %v271, %v273
    %v275 = vstv %s39
    %v276 = vmul.f32 %v222, %v275
    %v277 = vadd.f32 %v274, %v276
    %v278 = vstv %s40
    %v279 = vmul.f32 %v225, %v278
    %v280 = vadd.f32 %v277, %v279
    %v281 = vstv %s41
    %v282 = vmul.f32 %v228, %v281
    %v283 = vadd.f32 %v280, %v282
    %v284 = vstv %s42
    %v285 = vmul.f32 %v231, %v284
    %v286 = vadd.f32 %v283, %v285
    %v287 = vstv %s43
    %v288 = vmul.f32 %v234, %v287
    %v289 = vadd.f32 %v286, %v288
    %v290 = vstv %s72
    %v291 = vadd.f32 %v289, %v290
    %v292 = vmax.f32 %v291, 0.0
    %v293 = vstv %s44
    %v294 = vmul.f32 %v210, %v293
    %v295 = vstv %s45
    %v296 = vmul.f32 %v213, %v295
    %v297 = vadd.f32 %v294, %v296
    %v298 = vstv %s46
    %v299 = vmul.f32 %v216, %v298
    %v300 = vadd.f32 %v297, %v299
    %v301 = vstv %s47
    %v302 = vmul.f32 %v219, %v301
    %v303 = vadd.f32 %v300, %v302
    %v304 = vstv %s48
    %v305 = vmul.f32 %v222, %v304
    %v306 = vadd.f32 %v303, %v305
    %v307 = vstv %s49
    %v308 = vmul.f32 %v225, %v307
    %v309 = vadd.f32 %v306, %v308
    %v310 = vstv %s50
    %v311 = vmul.f32 %v228, %v310
    %v312 = vadd.f32 %v309, %v311
    %v313 = vstv %s51
    %v314 = vmul.f32 %v231, %v313
    %v315 = vadd.f32 %v312, %v314
    %v316 = vstv %s52
    %v317 = vmul.f32 %v234, %v316
    %v318 = vadd.f32 %v315, %v317
    %v319 = vstv %s73
    %v320 = vadd.f32 %v318, %v319
    %v321 = vmax.f32 %v320, 0.0
    %v322 = vstv %s53
    %v323 = vmul.f32 %v210, %v322
    %v324 = vstv %s54
    %v325 = vmul.f32 %v213, %v324
    %v326 = vadd.f32 %v323, %v325
    %v327 = vstv %s55
    %v328 = vmul.f32 %v216, %v327
    %v329 = vadd.f32 %v326, %v328
    %v330 = vstv %s56
    %v331 = vmul.f32 %v219, %v330
    %v332 = vadd.f32 %v329, %v331
    %v333 = vstv %s57
    %v334 = vmul.f32 %v222, %v333
    %v335 = vadd.f32 %v332, %v334
    %v336 = vstv %s58
    %v337 = vmul.f32 %v225, %v336
    %v338 = vadd.f32 %v335, %v337
    %v339 = vstv %s59
    %v340 = vmul.f32 %v228, %v339
    %v341 = vadd.f32 %v338, %v340
    %v342 = vstv %s60
    %v343 = vmul.f32 %v231, %v342
    %v344 = vadd.f32 %v341, %v343
    %v345 = vstv %s61
    %v346 = vmul.f32 %v234, %v345
    %v347 = vadd.f32 %v344, %v346
    %v348 = vstv %s74
    %v349 = vadd.f32 %v347, %v348
    %v350 = vmax.f32 %v349, 0.0
    %v351 = vstv %s62
    %v352 = vmul.f32 %v210, %v351
    %v353 = vstv %s63
    %v354 = vmul.f32 %v213, %v353
    %v355 = vadd.f32 %v352, %v354
    %v356 = vstv %s64
    %v357 = vmul.f32 %v216, %v356
    %v358 = vadd.f32 %v355, %v357
    %v359 = vstv %s65
    %v360 = vmul.f32 %v219, %v359
    %v361 = vadd.f32 %v358, %v360
    %v362 = vstv %s66
    %v363 = vmul.f32 %v222, %v362
    %v364 = vadd.f32 %v361, %v363
    %v365 = vstv %s67
    %v366 = vmul.f32 %v225, %v365
    %v367 = vadd.f32 %v364, %v366
    %v368 = vstv %s68
    %v369 = vmul.f32 %v228, %v368
    %v370 = vadd.f32 %v367, %v369
    %v371 = vstv %s69
    %v372 = vmul.f32 %v231, %v371
    %v373 = vadd.f32 %v370, %v372
    %v374 = vstv %s70
    %v375 = vmul.f32 %v234, %v374
    %v376 = vadd.f32 %v373, %v375
    %v377 = vstv %s75
    %v378 = vadd.f32 %v376, %v377
    %v379 = vmax.f32 %v378, 0.0
    %v380 = vstv %s76
    %v381 = vmul.f32 %v263, %v380
    %v382 = vstv %s77
    %v383 = vmul.f32 %v292, %v382
    %v384 = vadd.f32 %v381, %v383
    %v385 = vstv %s78
    %v386 = vmul.f32 %v321, %v385
    %v387 = vadd.f32 %v384, %v386
    %v388 = vstv %s79
    %v389 = vmul.f32 %v350, %v388
    %v390 = vadd.f32 %v387, %v389
    %v391 = vstv %s80
    %v392 = vmul.f32 %v379, %v391
    %v393 = vadd.f32 %v390, %v392
    %v394 = vstv %s96
    %v395 = vadd.f32 %v393, %v394
    %v396 = vmax.f32 %v395, 0.0
    %v397 = vstv %s81
    %v398 = vmul.f32 %v263, %v397
    %v399 = vstv %s82
    %v400 = vmul.f32 %v292, %v399
    %v401 = vadd.f32 %v398, %v400
    %v402 = vstv %s83
    %v403 = vmul.f32 %v321, %v402
    %v404 = vadd.f32 %v401, %v403
    %v405 = vstv %s84
    %v406 = vmul.f32 %v350, %v405
    %v407 = vadd.f32 %v404, %v406
    %v408 = vstv %s85
    %v409 = vmul.f32 %v379, %v408
    %v410 = vadd.f32 %v407, %v409
    %v411 = vstv %s97
    %v412 = vadd.f32 %v410, %v411
    %v413 = vmax.f32 %v412, 0.0
    %v414 = vstv %s86
    %v415 = vmul.f32 %v263, %v414
    %v416 = vstv %s87
    %v417 = vmul.f32 %v292, %v416
    %v418 = vadd.f32 %v415, %v417
    %v419 = vstv %s88
    %v420 = vmul.f32 %v321, %v419
    %v421 = vadd.f32 %v418, %v420
    %v422 = vstv %s89
    %v423 = vmul.f32 %v350, %v422
    %v424 = vadd.f32 %v421, %v423
    %v425 = vstv %s90
    %v426 = vmul.f32 %v379, %v425
    %v427 = vadd.f32 %v424, %v426
    %v428 = vstv %s98
    %v429 = vadd.f32 %v427, %v428
    %v430 = vmax.f32 %v429, 0.0
    %v431 = vstv %s91
    %v432 = vmul.f32 %v263, %v431
    %v433 = vstv %s92
    %v434 = vmul.f32 %v292, %v433
    %v435 = vadd.f32 %v432, %v434
    %v436 = vstv %s93
    %v437 = vmul.f32 %v321, %v436
    %v438 = vadd.f32 %v435, %v437
    %v439 = vstv %s94
    %v440 = vmul.f32 %v350, %v439
    %v441 = vadd.f32 %v438, %v440
    %v442 = vstv %s95
    %v443 = vmul.f32 %v379, %v442
    %v444 = vadd.f32 %v441, %v443
    %v445 = vstv %s99
    %v446 = vadd.f32 %v444, %v445
    %v447 = vmax.f32 %v446, 0.0
    %v448 = vstv %s100
    %v449 = vmul.f32 %v396, %v448
    %v450 = vstv %s101
    %v451 = vmul.f32 %v413, %v450
    %v452 = vadd.f32 %v449, %v451
    %v453 = vstv %s102
    %v454 = vmul.f32 %v430, %v453
    %v455 = vadd.f32 %v452, %v454
    %v456 = vstv %s103
    %v457 = vmul.f32 %v447, %v456
    %v458 = vadd.f32 %v455, %v457
    %v459 = vstv %s112
    %v460 = vadd.f32 %v458, %v459
    %v461 = vstv %s104
    %v462 = vmul.f32 %v396, %v461
    %v463 = vstv %s105
    %v464 = vmul.f32 %v413, %v463
    %v465 = vadd.f32 %v462, %v464
    %v466 = vstv %s106
    %v467 = vmul.f32 %v430, %v466
    %v468 = vadd.f32 %v465, %v467
    %v469 = vstv %s107
    %v470 = vmul.f32 %v447, %v469
    %v471 = vadd.f32 %v468, %v470
    %v472 = vstv %s113
    %v473 = vadd.f32 %v471, %v472
    %v474 = vstv %s108
    %v475 = vmul.f32 %v396, %v474
    %v476 = vstv %s109
    %v477 = vmul.f32 %v413, %v476
    %v478 = vadd.f32 %v475, %v477
    %v479 = vstv %s110
    %v480 = vmul.f32 %v430, %v479
    %v481 = vadd.f32 %v478, %v480
    %v482 = vstv %s111
    %v483 = vmul.f32 %v447, %v482
    %v484 = vadd.f32 %v481, %v483
    %v485 = vstv %s114
    %v486 = vadd.f32 %v484, %v485
    %v487 = vstv %s115
    %v488 = vmul.f32 %v460, %v487
    %v489 = vstv %s116
    %v490 = vmul.f32 %v473, %v489
    %v491 = vadd.f32 %v488, %v490
    %v492 = vstv %s117
    %v493 = vmul.f32 %v486, %v492
    %v494 = vadd.f32 %v491, %v493
    %v495 = vstv %s127
    %v496 = vadd.f32 %v494, %v495
    %v497 = vmax.f32 %v496, 0.0
    %v498 = vstv %s118
    %v499 = vmul.f32 %v460, %v498
    %v500 = vstv %s119
    %v501 = vmul.f32 %v473, %v500
    %v502 = vadd.f32 %v499, %v501
    %v503 = vstv %s120
    %v504 = vmul.f32 %v486, %v503
    %v505 = vadd.f32 %v502, %v504
    %v506 = vstv %s128
    %v507 = vadd.f32 %v505, %v506
    %v508 = vmax.f32 %v507, 0.0
    %v509 = vstv %s121
    %v510 = vmul.f32 %v460, %v509
    %v511 = vstv %s122
    %v512 = vmul.f32 %v473, %v511
    %v513 = vadd.f32 %v510, %v512
    %v514 = vstv %s123
    %v515 = vmul.f32 %v486, %v514
    %v516 = vadd.f32 %v513, %v515
    %v517 = vstv %s129
    %v518 = vadd.f32 %v516, %v517
    %v519 = vmax.f32 %v518, 0.0
    %v520 = vstv %s124
    %v521 = vmul.f32 %v460, %v520
    %v522 = vstv %s125
    %v523 = vmul.f32 %v473, %v522
    %v524 = vadd.f32 %v521, %v523
    %v525 = vstv %s126
    %v526 = vmul.f32 %v486, %v525
    %v527 = vadd.f32 %v524, %v526
    %v528 = vstv %s130
    %v529 = vadd.f32 %v527, %v528
    %v530 = vmax.f32 %v529, 0.0
    %v531 = vstv %s131
    %v532 = vmul.f32 %v497, %v531
    %v533 = vstv %s132
    %v534 = vmul.f32 %v508, %v533
    %v535 = vadd.f32 %v532, %v534
    %v536 = vstv %s133
    %v537 = vmul.f32 %v519, %v536
    %v538 = vadd.f32 %v535, %v537
    %v539 = vstv %s134
    %v540 = vmul.f32 %v530, %v539
    %v541 = vadd.f32 %v538, %v540
    %v542 = vstv %s151
    %v543 = vadd.f32 %v541, %v542
    %v544 = vmax.f32 %v543, 0.0
    %v545 = vstv %s135
    %v546 = vmul.f32 %v497, %v545
    %v547 = vstv %s136
    %v548 = vmul.f32 %v508, %v547
    %v549 = vadd.f32 %v546, %v548
    %v550 = vstv %s137
    %v551 = vmul.f32 %v519, %v550
    %v552 = vadd.f32 %v549, %v551
    %v553 = vstv %s138
    %v554 = vmul.f32 %v530, %v553
    %v555 = vadd.f32 %v552, %v554
    %v556 = vstv %s152
    %v557 = vadd.f32 %v555, %v556
    %v558 = vmax.f32 %v557, 0.0
    %v559 = vstv %s139
    %v560 = vmul.f32 %v497, %v559
    %v561 = vstv %s140
    %v562 = vmul.f32 %v508, %v561
    %v563 = vadd.f32 %v560, %v562
    %v564 = vstv %s141
    %v565 = vmul.f32 %v519, %v564
    %v566 = vadd.f32 %v563, %v565
    %v567 = vstv %s142
    %v568 = vmul.f32 %v530, %v567
    %v569 = vadd.f32 %v566, %v568
    %v570 = vstv %s153
    %v571 = vadd.f32 %v569, %v570
    %v572 = vmax.f32 %v571, 0.0
    %v573 = vstv %s143
    %v574 = vmul.f32 %v497, %v573
    %v575 = vstv %s144
    %v576 = vmul.f32 %v508, %v575
    %v577 = vadd.f32 %v574, %v576
    %v578 = vstv %s145
    %v579 = vmul.f32 %v519, %v578
    %v580 = vadd.f32 %v577, %v579
    %v581 = vstv %s146
    %v582 = vmul.f32 %v530, %v581
    %v583 = vadd.f32 %v580, %v582
    %v584 = vstv %s154
    %v585 = vadd.f32 %v583, %v584
    %v586 = vmax.f32 %v585, 0.0
    %v587 = vstv %s147
    %v588 = vmul.f32 %v497, %v587
    %v589 = vstv %s148
    %v590 = vmul.f32 %v508, %v589
    %v591 = vadd.f32 %v588, %v590
    %v592 = vstv %s149
    %v593 = vmul.f32 %v519, %v592
    %v594 = vadd.f32 %v591, %v593
    %v595 = vstv %s150
    %v596 = vmul.f32 %v530, %v595
    %v597 = vadd.f32 %v594, %v596
    %v598 = vstv %s155
    %v599 = vadd.f32 %v597, %v598
    %v600 = vmax.f32 %v599, 0.0
    %v601 = vstv %s156
    %v602 = vmul.f32 %v544, %v601
    %v603 = vstv %s157
    %v604 = vmul.f32 %v558, %v603
    %v605 = vadd.f32 %v602, %v604
    %v606 = vstv %s158
    %v607 = vmul.f32 %v572, %v606
    %v608 = vadd.f32 %v605, %v607
    %v609 = vstv %s159
    %v610 = vmul.f32 %v586, %v609
    %v611 = vadd.f32 %v608, %v610
    %v612 = vstv %s160
    %v613 = vmul.f32 %v600, %v612
    %v614 = vadd.f32 %v611, %v613
    %v615 = vstv %s201
    %v616 = vadd.f32 %v614, %v615
    %v617 = vstv %s161
    %v618 = vmul.f32 %v544, %v617
    %v619 = vstv %s162
    %v620 = vmul.f32 %v558, %v619
    %v621 = vadd.f32 %v618, %v620
    %v622 = vstv %s163
    %v623 = vmul.f32 %v572, %v622
    %v624 = vadd.f32 %v621, %v623
    %v625 = vstv %s164
    %v626 = vmul.f32 %v586, %v625
    %v627 = vadd.f32 %v624, %v626
    %v628 = vstv %s165
    %v629 = vmul.f32 %v600, %v628
    %v630 = vadd.f32 %v627, %v629
    %v631 = vstv %s202
    %v632 = vadd.f32 %v630, %v631
    %v633 = vstv %s166
    %v634 = vmul.f32 %v544, %v633
    %v635 = vstv %s167
    %v636 = vmul.f32 %v558, %v635
    %v637 = vadd.f32 %v634, %v636
    %v638 = vstv %s168
    %v639 = vmul.f32 %v572, %v638
    %v640 = vadd.f32 %v637, %v639
    %v641 = vstv %s169
    %v642 = vmul.f32 %v586, %v641
    %v643 = vadd.f32 %v640, %v642
    %v644 = vstv %s170
    %v645 = vmul.f32 %v600, %v644
    %v646 = vadd.f32 %v643, %v645
    %v647 = vstv %s203
    %v648 = vadd.f32 %v646, %v647
    %v649 = vstv %s171
    %v650 = vmul.f32 %v544, %v649
    %v651 = vstv %s172
    %v652 = vmul.f32 %v558, %v651
    %v653 = vadd.f32 %v650, %v652
    %v654 = vstv %s173
    %v655 = vmul.f32 %v572, %v654
    %v656 = vadd.f32 %v653, %v655
    %v657 = vstv %s174
    %v658 = vmul.f32 %v586, %v657
    %v659 = vadd.f32 %v656, %v658
    %v660 = vstv %s175
    %v661 = vmul.f32 %v600, %v660
    %v662 = vadd.f32 %v659, %v661
    %v663 = vstv %s204
    %v664 = vadd.f32 %v662, %v663
    %v665 = vstv %s176
    %v666 = vmul.f32 %v544, %v665
    %v667 = vstv %s177
    %v668 = vmul.f32 %v558, %v667
    %v669 = vadd.f32 %v666, %v668
    %v670 = vstv %s178
    %v671 = vmul.f32 %v572, %v670
    %v672 = vadd.f32 %v669, %v671
    %v673 = vstv %s179
    %v674 = vmul.f32 %v586, %v673
    %v675 = vadd.f32 %v672, %v674
    %v676 = vstv %s180
    %v677 = vmul.f32 %v600, %v676
    %v678 = vadd.f32 %v675, %v677
    %v679 = vstv %s205
    %v680 = vadd.f32 %v678, %v679
    %v681 = vstv %s181
    %v682 = vmul.f32 %v544, %v681
    %v683 = vstv %s182
    %v684 = vmul.f32 %v558, %v683
    %v685 = vadd.f32 %v682, %v684
    %v686 = vstv %s183
    %v687 = vmul.f32 %v572, %v686
    %v688 = vadd.f32 %v685, %v687
    %v689 = vstv %s184
    %v690 = vmul.f32 %v586, %v689
    %v691 = vadd.f32 %v688, %v690
    %v692 = vstv %s185
    %v693 = vmul.f32 %v600, %v692
    %v694 = vadd.f32 %v691, %v693
    %v695 = vstv %s206
    %v696 = vadd.f32 %v694, %v695
    %v697 = vstv %s186
    %v698 = vmul.f32 %v544, %v697
    %v699 = vstv %s187
    %v700 = vmul.f32 %v558, %v699
    %v701 = vadd.f32 %v698, %v700
    %v702 = vstv %s188
    %v703 = vmul.f32 %v572, %v702
    %v704 = vadd.f32 %v701, %v703
    %v705 = vstv %s189
    %v706 = vmul.f32 %v586, %v705
    %v707 = vadd.f32 %v704, %v706
    %v708 = vstv %s190
    %v709 = vmul.f32 %v600, %v708
    %v710 = vadd.f32 %v707, %v709
    %v711 = vstv %s207
    %v712 = vadd.f32 %v710, %v711
    %v713 = vstv %s191
    %v714 = vmul.f32 %v544, %v713
    %v715 = vstv %s192
    %v716 = vmul.f32 %v558, %v715
    %v717 = vadd.f32 %v714, %v716
    %v718 = vstv %s193
    %v719 = vmul.f32 %v572, %v718
    %v720 = vadd.f32 %v717, %v719
    %v721 = vstv %s194
    %v722 = vmul.f32 %v586, %v721
    %v723 = vadd.f32 %v720, %v722
    %v724 = vstv %s195
    %v725 = vmul.f32 %v600, %v724
    %v726 = vadd.f32 %v723, %v725
    %v727 = vstv %s208
    %v728 = vadd.f32 %v726, %v727
    %v729 = vstv %s196
    %v730 = vmul.f32 %v544, %v729
    %v731 = vstv %s197
    %v732 = vmul.f32 %v558, %v731
    %v733 = vadd.f32 %v730, %v732
    %v734 = vstv %s198
    %v735 = vmul.f32 %v572, %v734
    %v736 = vadd.f32 %v733, %v735
    %v737 = vstv %s199
    %v738 = vmul.f32 %v586, %v737
    %v739 = vadd.f32 %v736, %v738
    %v740 = vstv %s200
    %v741 = vmul.f32 %v600, %v740
    %v742 = vadd.f32 %v739, %v741
    %v743 = vstv %s209
    %v744 = vadd.f32 %v742, %v743
    %745 = vst [vmem:[%s2] sm:$0xff] %v460
    %s746 = scalar_lea.vmem %s2, %s211
    %747 = vst [vmem:[%s746] sm:$0xff] %v473
    %s748 = scalar_lea.vmem %s2, %s214
    %749 = vst [vmem:[%s748] sm:$0xff] %v486
    %750 = vst [vmem:[%s3] sm:$0xff] %v616
    %s751 = scalar_lea.vmem %s3, %s211
    %752 = vst [vmem:[%s751] sm:$0xff] %v632
    %s753 = scalar_lea.vmem %s3, %s214
    %754 = vst [vmem:[%s753] sm:$0xff] %v648
    %s755 = scalar_lea.vmem %s3, %s217
    %756 = vst [vmem:[%s755] sm:$0xff] %v664
    %s757 = scalar_lea.vmem %s3, %s220
    %758 = vst [vmem:[%s757] sm:$0xff] %v680
    %s759 = scalar_lea.vmem %s3, %s223
    %760 = vst [vmem:[%s759] sm:$0xff] %v696
    %s761 = scalar_lea.vmem %s3, %s226
    %762 = vst [vmem:[%s761] sm:$0xff] %v712
    %s763 = scalar_lea.vmem %s3, %s229
    %764 = vst [vmem:[%s763] sm:$0xff] %v728
    %s765 = scalar_lea.vmem %s3, %s232
    %766 = vst [vmem:[%s765] sm:$0xff] %v744
    // Predicated region
    $region14: #{autocoder_forward.1} parent=1 // pred_check
      _
    $region15: #{autocoder_forward.1} parent=1 // pred_check_branch
      %768 = sbr.rel (0) target = $region17
    $region16: #{autocoder_forward.1} parent=1 // pred_region
      _
    $region17: #{autocoder_forward.1} parent=1 // pred_fallthru
      _
    // Predicated region
    $region18: #{autocoder_forward.1} parent=1 // pred_check
      _
    $region19: #{autocoder_forward.1} parent=1 // pred_check_branch
      %770 = sbr.rel (0) target = $region21
    $region20: #{autocoder_forward.1} parent=1 // pred_region
      _
    $region21: #{autocoder_forward.1} parent=1 // pred_fallthru
      _
    // Predicated region
    $region22: #{autocoder_forward.1} parent=1 // pred_check
      _
    $region23: #{autocoder_forward.1} parent=1 // pred_check_branch
      %772 = sbr.rel (0) target = $region25
    $region24: #{autocoder_forward.1} parent=1 // pred_region
      _
    $region25: #{autocoder_forward.1} parent=1 // pred_fallthru
      _
    // Predicated region
    $region26: #{autocoder_forward.1} parent=1 // pred_check
      _
    $region27: #{autocoder_forward.1} parent=1 // pred_check_branch
      %774 = sbr.rel (0) target = $region29
    $region28: #{autocoder_forward.1} parent=1 // pred_region
      _
    $region29: #{autocoder_forward.1} parent=1 // pred_fallthru
      _
    %775 = vsyncpa [#allocation3], 1

</llo_original>
